<compile_context>
chip_gen: v5e
topology: v5e:2x2
jax: 0.10.0
libtpu: 0.0.40
codegen_flags: <defaults>
</compile_context>

<pallas_src>
import jax
import jax.numpy as jnp
from jax.experimental import pallas as pl
from jax.experimental.pallas import tpu as pltpu

# ----------------------------- model config ---------------------------------
D_DIM = 32                 # d_model
E_DIM = 64                 # unused in forward math, kept for signature parity
D_STATE = 8
DT_RANK = 2
D_CONV = 4
EXPAND = 2
D_INNER = EXPAND * D_DIM   # 64
BATCH = 2
SEQ = 8
BS = BATCH * SEQ           # 16 flattened tokens

# -------------------- packed parameter slab layout ---------------------------
# Slab W (matrix slab): every sub-matrix starts on a 128-lane boundary.
W_ROWS = D_INNER                     # 64
COL_ADA_W = 0                        # [0:2*D_DIM , +3*D_DIM ]  adaLN linear
COL_IN_W = 128                       # [0:D_DIM   , +2*D_INNER] in_proj
COL_DT_W = 256                       # [0:D_INNER , +D_INNER  ] folded low-rank dt
COL_OUT_W = 384                      # [0:D_INNER , +D_DIM    ] out_proj
COL_WBC = 512                        # [0:2*D_STATE, +D_INNER ] (W_B ; W_C)^T
COL_PERMS = 640                      # [0:BS, 0:BS] fwd perm | [.,+BS] inv perm | [.,+D_CONV] causal mask
W_COLS = 768

# Slab V (vector slab): per-channel rows, all starting at lane 0.
ROW_LN_G, ROW_LN_B, ROW_ADA_B, ROW_IN_B = 0, 1, 2, 3
ROW_CONV_B, ROW_DT_B, ROW_D, ROW_OUT_B = 4, 5, 6, 7
ROW_CONV_W = 8                       # rows 8:12  -> conv taps  [D_CONV, D_INNER]
ROW_A = 12                           # rows 12:20 -> A^T        [D_STATE, D_INNER]
V_ROWS, V_COLS = 24, 128


def _silu(x):
    return x * jax.nn.sigmoid(x)


# ------------------------------ fused kernel ---------------------------------
def fused_zig_mamba_kernel(x_ref, c_ref, wm_ref, vv_ref, o_ref):
    f32 = jnp.float32
    d, d_in, ds, k = D_DIM, D_INNER, D_STATE, D_CONV
    s, b, bs = SEQ, BATCH, BS

    x = x_ref[...]                                            # [bs, d]
    c = c_ref[...]                                            # [b, 2d]

    # --- static views into the two packed parameter slabs (aligned starts) ---
    ada_w = wm_ref[0:2 * d, COL_ADA_W:COL_ADA_W + 3 * d]      # [64, 96]
    in_w = wm_ref[0:d, COL_IN_W:COL_IN_W + 2 * d_in]          # [32, 128]
    w_dt = wm_ref[0:d_in, COL_DT_W:COL_DT_W + d_in]           # [64, 64]
    out_w = wm_ref[0:d_in, COL_OUT_W:COL_OUT_W + d]           # [64, 32]
    wbc_t = wm_ref[0:2 * ds, COL_WBC:COL_WBC + d_in]          # [16, 64]
    pcm = wm_ref[0:bs, COL_PERMS:COL_PERMS + 128]             # [16, 128] (perms + mask)
    p_fwd = pcm[:, 0:bs]                                      # [16, 16]
    p_inv = pcm[:, bs:2 * bs]                                 # [16, 16]
    cmask = pcm[:, 2 * bs:2 * bs + k]                         # [16, 4]

    ln_g = vv_ref[ROW_LN_G:ROW_LN_G + 1, 0:d]
    ln_b = vv_ref[ROW_LN_B:ROW_LN_B + 1, 0:d]
    ada_b = vv_ref[ROW_ADA_B:ROW_ADA_B + 1, 0:3 * d]
    in_b = vv_ref[ROW_IN_B:ROW_IN_B + 1, 0:2 * d_in]
    conv_b = vv_ref[ROW_CONV_B:ROW_CONV_B + 1, 0:d_in]
    dt_b = vv_ref[ROW_DT_B:ROW_DT_B + 1, 0:d_in]
    d_skip = vv_ref[ROW_D:ROW_D + 1, 0:d_in]
    out_b = vv_ref[ROW_OUT_B:ROW_OUT_B + 1, 0:d]
    conv_w = vv_ref[ROW_CONV_W:ROW_CONV_W + k, 0:d_in]        # [4, 64]
    a_t = vv_ref[ROW_A:ROW_A + ds, 0:d_in]                    # [8, 64]

    # --- adaLN: shift/scale/gate = chunk(Linear(SiLU(c)), 3), batched over B ---
    mod = jnp.dot(_silu(c), ada_w, preferred_element_type=f32) + ada_b     # [b, 3d]
    mod_e = jnp.concatenate(
        [jnp.broadcast_to(mod[i:i + 1, :], (s, 3 * d)) for i in range(b)], axis=0)
    shift_msa = mod_e[:, 0:d]
    scale_msa = mod_e[:, d:2 * d]
    gate_msa = mod_e[:, 2 * d:3 * d]

    # --- LayerNorm(d) + modulate ---
    mean = jnp.mean(x, axis=-1, keepdims=True)
    xc = x - mean
    var = jnp.mean(xc * xc, axis=-1, keepdims=True)
    xn = xc * jax.lax.rsqrt(var + 1e-5) * ln_g + ln_b
    x_mod = xn * (1.0 + scale_msa) + shift_msa                             # [bs, d]

    # --- zig-zag permutation (block-diagonal over batch) ---
    x_perm = jnp.dot(p_fwd, x_mod, preferred_element_type=f32)             # [bs, d]

    # --- in_proj (lane-dense, N = 128) ---
    xz = jnp.dot(x_perm, in_w, preferred_element_type=f32) + in_b          # [bs, 128]
    x_in = xz[:, 0:d_in]
    z = xz[:, d_in:2 * d_in]

    # --- causal depthwise conv1d: zero-prepended static sublane shifts + mask
    #     (mask also prevents batch-1 taps from leaking into batch-0 rows). ---
    xpad = jnp.concatenate([jnp.zeros((k - 1, d_in), f32), x_in], axis=0)  # [bs+3, 64]
    acc = x_in * conv_w[k - 1:k, :]
    for m in range(1, k):
        tap = xpad[k - 1 - m:k - 1 - m + bs, :]                            # x_in shifted by m
        acc = acc + (tap * cmask[:, m:m + 1]) * conv_w[k - 1 - m:k - m, :]
    u = _silu(acc + conv_b)                                                # [bs, d_in]

    # --- dt (exact folded low-rank) + merged B/C projection (one NT dot) ---
    dt_raw = jnp.dot(u, w_dt, preferred_element_type=f32) + dt_b           # [bs, d_in]
    delta = jnp.maximum(dt_raw, 0.0) + jnp.log(1.0 + jnp.exp(-jnp.abs(dt_raw)))
    bc_t = jax.lax.dot_general(wbc_t, u, (((1,), (1,)), ((), ())),
                               preferred_element_type=f32)                 # [2*ds, bs]
    bt = bc_t[0:ds, :]                                                     # [ds, bs]
    ct = bc_t[ds:2 * ds, :]                                                # [ds, bs]
    du = delta * u                                                         # [bs, d_in]

    # --- selective scan (statically unrolled; dA/dBu do not depend on h so the
    #     scheduler hoists them off the recurrence critical path) ---
    y_rows = []
    for bi in range(b):
        h = jnp.zeros((ds, d_in), f32)
        for t in range(s):
            rr = bi * s + t
            da_t = jnp.exp(delta[rr:rr + 1, :] * a_t)                      # [ds, d_in]
            dbu_t = bt[:, rr:rr + 1] * du[rr:rr + 1, :]                    # [ds, d_in]
            h = da_t * h + dbu_t
            y_rows.append(jnp.sum(h * ct[:, rr:rr + 1], axis=0, keepdims=True))
    y_ssm = jnp.concatenate(y_rows, axis=0)                                # [bs, d_in]

    # --- D skip, SiLU(z) gate, out_proj, inverse permutation, gated residual ---
    y = (y_ssm + d_skip * u) * _silu(z)
    y_out = jnp.dot(y, out_w, preferred_element_type=f32) + out_b          # [bs, d]
    y_out = jnp.dot(p_inv, y_out, preferred_element_type=f32)
    o_ref[...] = x + gate_msa * y_out                                      # ONE dense store


# ------------------------------ wrapper ---------------------------------------
def zig_mamba_block_forward(x, c, w, params):
    del w  # unused by the reference forward (kept for signature parity)
    b, s, d = x.shape
    bs = b * s
    x_flat = x.reshape(bs, d)

    out_flat = pl.pallas_call(
        fused_zig_mamba_kernel,
        out_shape=jax.ShapeDtypeStruct((bs, d), jnp.float32),
        grid=(1,),                                              # single fused step
        in_specs=[
            pl.BlockSpec((bs, d), lambda i: (0, 0)),            # x, flattened tokens
            pl.BlockSpec((b, 2 * d), lambda i: (0, 0)),         # c (full block)
            pl.BlockSpec((W_ROWS, W_COLS), lambda i: (0, 0)),   # packed matrix slab
            pl.BlockSpec((V_ROWS, V_COLS), lambda i: (0, 0)),   # packed vector slab
        ],
        out_specs=pl.BlockSpec((bs, d), lambda i: (0, 0)),
        compiler_params=pltpu.CompilerParams(dimension_semantics=("arbitrary",)),
    )(x_flat, c, params["slab_w"], params["slab_v"])
    return out_flat.reshape(b, s, d)


# ------------------------------ parameter init --------------------------------
def xavier_uniform(key, shape):
    fan_in, fan_out = shape
    limit = (6.0 / (fan_in + fan_out)) ** 0.5
    return jax.random.uniform(key, shape, jnp.float32, -limit, limit)


def init_params(key):
    ks = jax.random.split(key, 8)
    d, d_in, ds, k, r = D_DIM, D_INNER, D_STATE, D_CONV, DT_RANK

    # zig-zag token permutation over the sequence and its inverse
    token_list = []
    lo, hi = 0, SEQ - 1
    while lo <= hi:
        token_list.append(lo)
        if lo != hi:
            token_list.append(hi)
        lo += 1
        hi -= 1
    token_idx = jnp.asarray(token_list, jnp.int32)
    orig_idx = jnp.argsort(token_idx)
    p_fwd_seq = jax.nn.one_hot(token_idx, SEQ, dtype=jnp.float32)
    p_inv_seq = jax.nn.one_hot(orig_idx, SEQ, dtype=jnp.float32)
    eye_b = jnp.eye(BATCH, dtype=jnp.float32)
    p_fwd = jnp.kron(eye_b, p_fwd_seq)       # block-diagonal [BS, BS]
    p_inv = jnp.kron(eye_b, p_inv_seq)

    # causal-tap mask for the flattened-token conv: mask[row, m] = (row % SEQ) >= m
    seq_pos = jnp.arange(BS, dtype=jnp.int32) % SEQ
    cmask = (seq_pos[:, None] >= jnp.arange(k, dtype=jnp.int32)[None, :]).astype(jnp.float32)

    ada_w = xavier_uniform(ks[0], (2 * d, 3 * d))
    ada_b = jnp.zeros((3 * d,), jnp.float32)
    ln_g = jnp.ones((d,), jnp.float32)
    ln_b = jnp.zeros((d,), jnp.float32)
    in_w = xavier_uniform(ks[1], (d, 2 * d_in))
    in_b = jnp.zeros((2 * d_in,), jnp.float32)

    conv_bound = 1.0 / (k ** 0.5)
    conv_w = jax.random.uniform(ks[2], (k, d_in), jnp.float32, -conv_bound, conv_bound)
    conv_b = jax.random.uniform(ks[3], (d_in,), jnp.float32, -conv_bound, conv_bound)

    xproj_w = xavier_uniform(ks[4], (d_in, r + 2 * ds))   # x_proj has no bias (Mamba)
    dt_w = xavier_uniform(ks[5], (r, d_in))
    dt_b = jax.random.uniform(ks[6], (d_in,), jnp.float32, -0.1, 0.1)

    # exact fold of the low-rank dt path (valid because x_proj has no bias)
    w_dt_fold = xproj_w[:, :r] @ dt_w                     # [d_in, d_in]
    wbc_t = xproj_w[:, r:].T                              # [2*d_state, d_in] (rows: B then C)

    A = -jnp.exp(jnp.broadcast_to(
        jnp.log(jnp.arange(1, ds + 1, dtype=jnp.float32)), (d_in, ds)))
    a_t = A.T                                             # [d_state, d_in]
    d_skip = jnp.ones((d_in,), jnp.float32)

    out_w = xavier_uniform(ks[7], (d_in, d))
    out_b = jnp.zeros((d,), jnp.float32)

    # ---- pack everything into two lane-dense slabs (2 parameter DMAs total) ----
    slab_w = jnp.zeros((W_ROWS, W_COLS), jnp.float32)
    slab_w = slab_w.at[0:2 * d, COL_ADA_W:COL_ADA_W + 3 * d].set(ada_w)
    slab_w = slab_w.at[0:d, COL_IN_W:COL_IN_W + 2 * d_in].set(in_w)
    slab_w = slab_w.at[0:d_in, COL_DT_W:COL_DT_W + d_in].set(w_dt_fold)
    slab_w = slab_w.at[0:d_in, COL_OUT_W:COL_OUT_W + d].set(out_w)
    slab_w = slab_w.at[0:2 * ds, COL_WBC:COL_WBC + d_in].set(wbc_t)
    slab_w = slab_w.at[0:BS, COL_PERMS:COL_PERMS + BS].set(p_fwd)
    slab_w = slab_w.at[0:BS, COL_PERMS + BS:COL_PERMS + 2 * BS].set(p_inv)
    slab_w = slab_w.at[0:BS, COL_PERMS + 2 * BS:COL_PERMS + 2 * BS + k].set(cmask)

    slab_v = jnp.zeros((V_ROWS, V_COLS), jnp.float32)
    slab_v = slab_v.at[ROW_LN_G, 0:d].set(ln_g)
    slab_v = slab_v.at[ROW_LN_B, 0:d].set(ln_b)
    slab_v = slab_v.at[ROW_ADA_B, 0:3 * d].set(ada_b)
    slab_v = slab_v.at[ROW_IN_B, 0:2 * d_in].set(in_b)
    slab_v = slab_v.at[ROW_CONV_B, 0:d_in].set(conv_b)
    slab_v = slab_v.at[ROW_DT_B, 0:d_in].set(dt_b)
    slab_v = slab_v.at[ROW_D, 0:d_in].set(d_skip)
    slab_v = slab_v.at[ROW_OUT_B, 0:d].set(out_b)
    slab_v = slab_v.at[ROW_CONV_W:ROW_CONV_W + k, 0:d_in].set(conv_w)
    slab_v = slab_v.at[ROW_A:ROW_A + ds, 0:d_in].set(a_t)

    raw = dict(ada_w=ada_w, ada_b=ada_b, ln_g=ln_g, ln_b=ln_b,
               token_idx=token_idx, orig_idx=orig_idx, in_w=in_w, in_b=in_b,
               conv_w=conv_w, conv_b=conv_b, w_dt_fold=w_dt_fold, dt_b=dt_b,
               wbc_t=wbc_t, a_t=a_t, d_skip=d_skip, out_w=out_w, out_b=out_b)
    return {"slab_w": slab_w, "slab_v": slab_v, "raw": raw}


# --------------------- pure-JAX reference (correctness check) -----------------
def reference_forward(x, c, raw):
    d, d_in, ds, k = D_DIM, D_INNER, D_STATE, D_CONV
    mod = _silu(c) @ raw["ada_w"] + raw["ada_b"]
    shift, scale, gate = mod[:, :d], mod[:, d:2 * d], mod[:, 2 * d:]
    mean = x.mean(-1, keepdims=True)
    xc = x - mean
    var = (xc * xc).mean(-1, keepdims=True)
    xn = xc * jax.lax.rsqrt(var + 1e-5) * raw["ln_g"] + raw["ln_b"]
    xm = xn * (1.0 + scale[:, None, :]) + shift[:, None, :]
    xp = xm[:, raw["token_idx"], :]
    xz = xp @ raw["in_w"] + raw["in_b"]
    x_in, z = xz[..., :d_in], xz[..., d_in:]
    xpad = jnp.pad(x_in, ((0, 0), (k - 1, 0), (0, 0)))
    u = sum(xpad[:, j:j + SEQ, :] * raw["conv_w"][j] for j in range(k)) + raw["conv_b"]
    u = _silu(u)
    delta = jax.nn.softplus(u @ raw["w_dt_fold"] + raw["dt_b"])
    bc = jnp.einsum("bsc,nc->bsn", u, raw["wbc_t"])
    b_proj, c_proj = bc[..., :ds], bc[..., ds:]
    a_t = raw["a_t"]

    def scan_one(delta_b, u_b, bb, cc):
        def step(h, inp):
            dl, uu, bt, ct = inp
            h = jnp.exp(dl[None, :] * a_t) * h + bt[:, None] * (dl * uu)[None, :]
            return h, jnp.sum(h * ct[:, None], axis=0)
        _, ys = jax.lax.scan(step, jnp.zeros((ds, d_in), jnp.float32),
                             (delta_b, u_b, bb, cc))
        return ys

    y_ssm = jax.vmap(scan_one)(delta, u, b_proj, c_proj)
    y = (y_ssm + raw["d_skip"] * u) * _silu(z)
    y_out = y @ raw["out_w"] + raw["out_b"]
    y_out = y_out[:, raw["orig_idx"], :]
    return x + gate[:, None, :] * y_out


# ---------------------------------- main --------------------------------------
if __name__ == "__main__":
    key = jax.random.PRNGKey(0)
    k_x, k_c, k_w, k_p = jax.random.split(key, 4)

    x = jax.random.normal(k_x, (BATCH, SEQ, D_DIM), jnp.float32)
    c = jax.random.normal(k_c, (BATCH, 2 * D_DIM), jnp.float32)
    w = jax.random.normal(k_w, (BATCH, D_DIM), jnp.float32)   # unused, signature parity

    params = init_params(k_p)

    out = zig_mamba_block_forward(x, c, w, params)
    out = jax.block_until_ready(out)

    assert out.shape == (BATCH, SEQ, D_DIM)
    assert bool(jnp.all(jnp.isfinite(out)))

    ref = reference_forward(x, c, params["raw"])
    max_err = float(jnp.max(jnp.abs(out - ref)))
    assert max_err < 5e-2, f"kernel/reference mismatch: max abs err = {max_err}"

    print("KERNEL_OK")
</pallas_src>

<mosaic_0001>
module attributes {stable_mosaic.version = 11 : i64} {
  func.func @fused_zig_mamba_kernel(%arg0: i32, %arg1: memref<16x32xf32, #tpu.memory_space<vmem>>, %arg2: memref<2x64xf32, #tpu.memory_space<vmem>>, %arg3: memref<64x768xf32, #tpu.memory_space<vmem>>, %arg4: memref<24x128xf32, #tpu.memory_space<vmem>>, %arg5: memref<16x32xf32, #tpu.memory_space<vmem>>) attributes {dimension_semantics = [#tpu.dimension_semantics<arbitrary>], iteration_bounds = array<i64: 1>, scalar_prefetch = 0 : i64, scratch_operands = 0 : i64, tpu.core_type = #tpu.core_type<tc>, window_params = [{pipeline_mode = #tpu.pipeline_mode<synchronous>, transform_indices = @transform_0, window_bounds = array<i64: 16, 32>}, {pipeline_mode = #tpu.pipeline_mode<synchronous>, transform_indices = @transform_1, window_bounds = array<i64: 2, 64>}, {pipeline_mode = #tpu.pipeline_mode<synchronous>, transform_indices = @transform_2, window_bounds = array<i64: 64, 768>}, {pipeline_mode = #tpu.pipeline_mode<synchronous>, transform_indices = @transform_3, window_bounds = array<i64: 24, 128>}, {pipeline_mode = #tpu.pipeline_mode<synchronous>, transform_indices = @transform_4, window_bounds = array<i64: 16, 32>}]} {
    %c0 = arith.constant 0 : index
    %c0_0 = arith.constant 0 : index
    %0 = vector.load %arg1[%c0, %c0_0] : memref<16x32xf32, #tpu.memory_space<vmem>>, vector<16x32xf32>
    %c0_1 = arith.constant 0 : index
    %c0_2 = arith.constant 0 : index
    %1 = vector.load %arg2[%c0_1, %c0_2] : memref<2x64xf32, #tpu.memory_space<vmem>>, vector<2x64xf32>
    %c0_3 = arith.constant 0 : index
    %c0_4 = arith.constant 0 : index
    %2 = vector.load %arg3[%c0_3, %c0_4] : memref<64x768xf32, #tpu.memory_space<vmem>>, vector<64x96xf32>
    %c0_5 = arith.constant 0 : index
    %c128 = arith.constant 128 : index
    %3 = vector.load %arg3[%c0_5, %c128] : memref<64x768xf32, #tpu.memory_space<vmem>>, vector<32x128xf32>
    %c0_6 = arith.constant 0 : index
    %c256 = arith.constant 256 : index
    %4 = vector.load %arg3[%c0_6, %c256] : memref<64x768xf32, #tpu.memory_space<vmem>>, vector<64x64xf32>
    %c0_7 = arith.constant 0 : index
    %c384 = arith.constant 384 : index
    %5 = vector.load %arg3[%c0_7, %c384] : memref<64x768xf32, #tpu.memory_space<vmem>>, vector<64x32xf32>
    %c0_8 = arith.constant 0 : index
    %c512 = arith.constant 512 : index
    %6 = vector.load %arg3[%c0_8, %c512] : memref<64x768xf32, #tpu.memory_space<vmem>>, vector<16x64xf32>
    %c0_9 = arith.constant 0 : index
    %c640 = arith.constant 640 : index
    %7 = vector.load %arg3[%c0_9, %c640] : memref<64x768xf32, #tpu.memory_space<vmem>>, vector<16x128xf32>
    %8 = vector.extract_strided_slice %7 {offsets = [0, 0], sizes = [16, 16], strides = [1, 1]} : vector<16x128xf32> to vector<16x16xf32>
    %9 = vector.extract_strided_slice %7 {offsets = [0, 16], sizes = [16, 16], strides = [1, 1]} : vector<16x128xf32> to vector<16x16xf32>
    %10 = vector.extract_strided_slice %7 {offsets = [0, 32], sizes = [16, 4], strides = [1, 1]} : vector<16x128xf32> to vector<16x4xf32>
    %c0_10 = arith.constant 0 : index
    %c0_11 = arith.constant 0 : index
    %11 = vector.load %arg4[%c0_10, %c0_11] : memref<24x128xf32, #tpu.memory_space<vmem>>, vector<1x32xf32>
    %c1 = arith.constant 1 : index
    %c0_12 = arith.constant 0 : index
    %12 = vector.load %arg4[%c1, %c0_12] : memref<24x128xf32, #tpu.memory_space<vmem>>, vector<1x32xf32>
    %c2 = arith.constant 2 : index
    %c0_13 = arith.constant 0 : index
    %13 = vector.load %arg4[%c2, %c0_13] : memref<24x128xf32, #tpu.memory_space<vmem>>, vector<1x96xf32>
    %c3 = arith.constant 3 : index
    %c0_14 = arith.constant 0 : index
    %14 = vector.load %arg4[%c3, %c0_14] : memref<24x128xf32, #tpu.memory_space<vmem>>, vector<1x128xf32>
    %c4 = arith.constant 4 : index
    %c0_15 = arith.constant 0 : index
    %15 = vector.load %arg4[%c4, %c0_15] : memref<24x128xf32, #tpu.memory_space<vmem>>, vector<1x64xf32>
    %c5 = arith.constant 5 : index
    %c0_16 = arith.constant 0 : index
    %16 = vector.load %arg4[%c5, %c0_16] : memref<24x128xf32, #tpu.memory_space<vmem>>, vector<1x64xf32>
    %c6 = arith.constant 6 : index
    %c0_17 = arith.constant 0 : index
    %17 = vector.load %arg4[%c6, %c0_17] : memref<24x128xf32, #tpu.memory_space<vmem>>, vector<1x64xf32>
    %c7 = arith.constant 7 : index
    %c0_18 = arith.constant 0 : index
    %18 = vector.load %arg4[%c7, %c0_18] : memref<24x128xf32, #tpu.memory_space<vmem>>, vector<1x32xf32>
    %c8 = arith.constant 8 : index
    %c0_19 = arith.constant 0 : index
    %19 = vector.load %arg4[%c8, %c0_19] : memref<24x128xf32, #tpu.memory_space<vmem>>, vector<4x64xf32>
    %c12 = arith.constant 12 : index
    %c0_20 = arith.constant 0 : index
    %20 = vector.load %arg4[%c12, %c0_20] : memref<24x128xf32, #tpu.memory_space<vmem>>, vector<8x64xf32>
    %21 = arith.negf %1 : vector<2x64xf32>
    %22 = math.exp %21 : vector<2x64xf32>
    %cst = arith.constant 1.000000e+00 : f32
    %23 = vector.broadcast %cst : f32 to vector<2x64xf32>
    %24 = arith.addf %23, %22 : vector<2x64xf32>
    %25 = arith.divf %23, %24 : vector<2x64xf32>
    %26 = arith.mulf %1, %25 : vector<2x64xf32>
    %cst_21 = arith.constant dense<0.000000e+00> : vector<2x96xf32>
    %27 = tpu.matmul %26, %2, %cst_21 {dimension_numbers = #tpu.dot_dimension_numbers<[1], [0], [0], [1], [0, 0, 1, 1], [], []>} : vector<2x64xf32>, vector<64x96xf32>, vector<2x96xf32> -> vector<2x96xf32>
    %28 = vector.broadcast %13 : vector<1x96xf32> to vector<2x96xf32>
    %29 = arith.addf %27, %28 : vector<2x96xf32>
    %30 = vector.extract_strided_slice %29 {offsets = [0, 0], sizes = [1, 96], strides = [1, 1]} : vector<2x96xf32> to vector<1x96xf32>
    %31 = vector.shape_cast %30 : vector<1x96xf32> to vector<1x96xf32>
    %32 = vector.broadcast %31 : vector<1x96xf32> to vector<8x96xf32>
    %33 = vector.extract_strided_slice %29 {offsets = [1, 0], sizes = [1, 96], strides = [1, 1]} : vector<2x96xf32> to vector<1x96xf32>
    %34 = vector.shape_cast %33 : vector<1x96xf32> to vector<1x96xf32>
    %35 = vector.broadcast %34 : vector<1x96xf32> to vector<8x96xf32>
    %36 = tpu.concatenate %32, %35 in 0 : vector<8x96xf32>, vector<8x96xf32> -> vector<16x96xf32>
    %37 = vector.extract_strided_slice %36 {offsets = [0, 0], sizes = [16, 32], strides = [1, 1]} : vector<16x96xf32> to vector<16x32xf32>
    %38 = vector.extract_strided_slice %36 {offsets = [0, 32], sizes = [16, 32], strides = [1, 1]} : vector<16x96xf32> to vector<16x32xf32>
    %39 = vector.extract_strided_slice %36 {offsets = [0, 64], sizes = [16, 32], strides = [1, 1]} : vector<16x96xf32> to vector<16x32xf32>
    %cst_22 = arith.constant dense<0.000000e+00> : vector<16xf32>
    %40 = vector.multi_reduction <add>, %0, %cst_22 [1] : vector<16x32xf32> to vector<16xf32>
    %41 = vector.shape_cast %40 : vector<16xf32> to vector<16x1xf32>
    %cst_23 = arith.constant 3.200000e+01 : f32
    %42 = vector.broadcast %cst_23 : f32 to vector<16x1xf32>
    %43 = arith.divf %41, %42 : vector<16x1xf32>
    %44 = vector.broadcast %43 : vector<16x1xf32> to vector<16x32xf32>
    %45 = arith.subf %0, %44 : vector<16x32xf32>
    %46 = arith.mulf %45, %45 : vector<16x32xf32>
    %cst_24 = arith.constant dense<0.000000e+00> : vector<16xf32>
    %47 = vector.multi_reduction <add>, %46, %cst_24 [1] : vector<16x32xf32> to vector<16xf32>
    %48 = vector.shape_cast %47 : vector<16xf32> to vector<16x1xf32>
    %cst_25 = arith.constant 3.200000e+01 : f32
    %49 = vector.broadcast %cst_25 : f32 to vector<16x1xf32>
    %50 = arith.divf %48, %49 : vector<16x1xf32>
    %cst_26 = arith.constant 9.99999974E-6 : f32
    %51 = vector.broadcast %cst_26 : f32 to vector<16x1xf32>
    %52 = arith.addf %50, %51 : vector<16x1xf32>
    %53 = math.rsqrt %52 : vector<16x1xf32>
    %54 = vector.broadcast %53 : vector<16x1xf32> to vector<16x32xf32>
    %55 = arith.mulf %45, %54 : vector<16x32xf32>
    %56 = vector.broadcast %11 : vector<1x32xf32> to vector<16x32xf32>
    %57 = arith.mulf %55, %56 : vector<16x32xf32>
    %58 = vector.broadcast %12 : vector<1x32xf32> to vector<16x32xf32>
    %59 = arith.addf %57, %58 : vector<16x32xf32>
    %cst_27 = arith.constant 1.000000e+00 : f32
    %60 = vector.broadcast %cst_27 : f32 to vector<16x32xf32>
    %61 = arith.addf %60, %38 : vector<16x32xf32>
    %62 = arith.mulf %59, %61 : vector<16x32xf32>
    %63 = arith.addf %62, %37 : vector<16x32xf32>
    %cst_28 = arith.constant dense<0.000000e+00> : vector<16x32xf32>
    %64 = tpu.matmul %8, %63, %cst_28 {dimension_numbers = #tpu.dot_dimension_numbers<[1], [0], [0], [1], [0, 0, 1, 1], [], []>} : vector<16x16xf32>, vector<16x32xf32>, vector<16x32xf32> -> vector<16x32xf32>
    %cst_29 = arith.constant dense<0.000000e+00> : vector<16x128xf32>
    %65 = tpu.matmul %64, %3, %cst_29 {dimension_numbers = #tpu.dot_dimension_numbers<[1], [0], [0], [1], [0, 0, 1, 1], [], []>} : vector<16x32xf32>, vector<32x128xf32>, vector<16x128xf32> -> vector<16x128xf32>
    %66 = vector.broadcast %14 : vector<1x128xf32> to vector<16x128xf32>
    %67 = arith.addf %65, %66 : vector<16x128xf32>
    %68 = vector.extract_strided_slice %67 {offsets = [0, 0], sizes = [16, 64], strides = [1, 1]} : vector<16x128xf32> to vector<16x64xf32>
    %69 = vector.extract_strided_slice %67 {offsets = [0, 64], sizes = [16, 64], strides = [1, 1]} : vector<16x128xf32> to vector<16x64xf32>
    %cst_30 = arith.constant 0.000000e+00 : f32
    %70 = vector.broadcast %cst_30 : f32 to vector<3x64xf32>
    %71 = tpu.concatenate %70, %68 in 0 : vector<3x64xf32>, vector<16x64xf32> -> vector<19x64xf32>
    %72 = vector.extract_strided_slice %19 {offsets = [3, 0], sizes = [1, 64], strides = [1, 1]} : vector<4x64xf32> to vector<1x64xf32>
    %73 = vector.broadcast %72 : vector<1x64xf32> to vector<16x64xf32>
    %74 = arith.mulf %68, %73 : vector<16x64xf32>
    %75 = vector.extract_strided_slice %71 {offsets = [2, 0], sizes = [16, 64], strides = [1, 1]} : vector<19x64xf32> to vector<16x64xf32>
    %76 = vector.extract_strided_slice %10 {offsets = [0, 1], sizes = [16, 1], strides = [1, 1]} : vector<16x4xf32> to vector<16x1xf32>
    %77 = vector.broadcast %76 : vector<16x1xf32> to vector<16x64xf32>
    %78 = arith.mulf %75, %77 : vector<16x64xf32>
    %79 = vector.extract_strided_slice %19 {offsets = [2, 0], sizes = [1, 64], strides = [1, 1]} : vector<4x64xf32> to vector<1x64xf32>
    %80 = vector.broadcast %79 : vector<1x64xf32> to vector<16x64xf32>
    %81 = arith.mulf %78, %80 : vector<16x64xf32>
    %82 = arith.addf %74, %81 : vector<16x64xf32>
    %83 = vector.extract_strided_slice %71 {offsets = [1, 0], sizes = [16, 64], strides = [1, 1]} : vector<19x64xf32> to vector<16x64xf32>
    %84 = vector.extract_strided_slice %10 {offsets = [0, 2], sizes = [16, 1], strides = [1, 1]} : vector<16x4xf32> to vector<16x1xf32>
    %85 = vector.broadcast %84 : vector<16x1xf32> to vector<16x64xf32>
    %86 = arith.mulf %83, %85 : vector<16x64xf32>
    %87 = vector.extract_strided_slice %19 {offsets = [1, 0], sizes = [1, 64], strides = [1, 1]} : vector<4x64xf32> to vector<1x64xf32>
    %88 = vector.broadcast %87 : vector<1x64xf32> to vector<16x64xf32>
    %89 = arith.mulf %86, %88 : vector<16x64xf32>
    %90 = arith.addf %82, %89 : vector<16x64xf32>
    %91 = vector.extract_strided_slice %71 {offsets = [0, 0], sizes = [16, 64], strides = [1, 1]} : vector<19x64xf32> to vector<16x64xf32>
    %92 = vector.extract_strided_slice %10 {offsets = [0, 3], sizes = [16, 1], strides = [1, 1]} : vector<16x4xf32> to vector<16x1xf32>
    %93 = vector.broadcast %92 : vector<16x1xf32> to vector<16x64xf32>
    %94 = arith.mulf %91, %93 : vector<16x64xf32>
    %95 = vector.extract_strided_slice %19 {offsets = [0, 0], sizes = [1, 64], strides = [1, 1]} : vector<4x64xf32> to vector<1x64xf32>
    %96 = vector.broadcast %95 : vector<1x64xf32> to vector<16x64xf32>
    %97 = arith.mulf %94, %96 : vector<16x64xf32>
    %98 = arith.addf %90, %97 : vector<16x64xf32>
    %99 = vector.broadcast %15 : vector<1x64xf32> to vector<16x64xf32>
    %100 = arith.addf %98, %99 : vector<16x64xf32>
    %101 = arith.negf %100 : vector<16x64xf32>
    %102 = math.exp %101 : vector<16x64xf32>
    %cst_31 = arith.constant 1.000000e+00 : f32
    %103 = vector.broadcast %cst_31 : f32 to vector<16x64xf32>
    %104 = arith.addf %103, %102 : vector<16x64xf32>
    %105 = arith.divf %103, %104 : vector<16x64xf32>
    %106 = arith.mulf %100, %105 : vector<16x64xf32>
    %cst_32 = arith.constant dense<0.000000e+00> : vector<16x64xf32>
    %107 = tpu.matmul %106, %4, %cst_32 {dimension_numbers = #tpu.dot_dimension_numbers<[1], [0], [0], [1], [0, 0, 1, 1], [], []>} : vector<16x64xf32>, vector<64x64xf32>, vector<16x64xf32> -> vector<16x64xf32>
    %108 = vector.broadcast %16 : vector<1x64xf32> to vector<16x64xf32>
    %109 = arith.addf %107, %108 : vector<16x64xf32>
    %cst_33 = arith.constant 0.000000e+00 : f32
    %110 = vector.broadcast %cst_33 : f32 to vector<16x64xf32>
    %111 = arith.maximumf %109, %110 : vector<16x64xf32>
    %112 = math.absf %109 : vector<16x64xf32>
    %cst_34 = arith.constant 0.000000e+00 : f32
    %113 = vector.broadcast %cst_34 : f32 to vector<16x64xf32>
    %114 = arith.subf %113, %112 : vector<16x64xf32>
    %115 = math.exp %114 : vector<16x64xf32>
    %cst_35 = arith.constant 1.000000e+00 : f32
    %116 = vector.broadcast %cst_35 : f32 to vector<16x64xf32>
    %117 = arith.addf %116, %115 : vector<16x64xf32>
    %118 = math.log %117 : vector<16x64xf32>
    %119 = arith.addf %111, %118 : vector<16x64xf32>
    %cst_36 = arith.constant dense<0.000000e+00> : vector<16x16xf32>
    %120 = tpu.matmul %6, %106, %cst_36 {dimension_numbers = #tpu.dot_dimension_numbers<[1], [1], [0], [0], [0, 0, 1, 0], [], []>} : vector<16x64xf32>, vector<16x64xf32>, vector<16x16xf32> -> vector<16x16xf32>
    %121 = vector.extract_strided_slice %120 {offsets = [0, 0], sizes = [8, 16], strides = [1, 1]} : vector<16x16xf32> to vector<8x16xf32>
    %122 = vector.extract_strided_slice %120 {offsets = [8, 0], sizes = [8, 16], strides = [1, 1]} : vector<16x16xf32> to vector<8x16xf32>
    %123 = arith.mulf %119, %106 : vector<16x64xf32>
    %cst_37 = arith.constant 0.000000e+00 : f32
    %124 = vector.broadcast %cst_37 : f32 to vector<8x64xf32>
    %125 = vector.extract_strided_slice %119 {offsets = [0, 0], sizes = [1, 64], strides = [1, 1]} : vector<16x64xf32> to vector<1x64xf32>
    %126 = vector.broadcast %125 : vector<1x64xf32> to vector<8x64xf32>
    %127 = arith.mulf %126, %20 : vector<8x64xf32>
    %128 = math.exp %127 : vector<8x64xf32>
    %129 = vector.extract_strided_slice %121 {offsets = [0, 0], sizes = [8, 1], strides = [1, 1]} : vector<8x16xf32> to vector<8x1xf32>
    %130 = vector.extract_strided_slice %123 {offsets = [0, 0], sizes = [1, 64], strides = [1, 1]} : vector<16x64xf32> to vector<1x64xf32>
    %131 = vector.broadcast %129 : vector<8x1xf32> to vector<8x64xf32>
    %132 = vector.broadcast %130 : vector<1x64xf32> to vector<8x64xf32>
    %133 = arith.mulf %131, %132 : vector<8x64xf32>
    %134 = arith.mulf %128, %124 : vector<8x64xf32>
    %135 = arith.addf %134, %133 : vector<8x64xf32>
    %136 = vector.extract_strided_slice %122 {offsets = [0, 0], sizes = [8, 1], strides = [1, 1]} : vector<8x16xf32> to vector<8x1xf32>
    %137 = vector.broadcast %136 : vector<8x1xf32> to vector<8x64xf32>
    %138 = arith.mulf %135, %137 : vector<8x64xf32>
    %cst_38 = arith.constant dense<0.000000e+00> : vector<64xf32>
    %139 = vector.multi_reduction <add>, %138, %cst_38 [0] : vector<8x64xf32> to vector<64xf32>
    %140 = vector.shape_cast %139 : vector<64xf32> to vector<1x64xf32>
    %141 = vector.extract_strided_slice %119 {offsets = [1, 0], sizes = [1, 64], strides = [1, 1]} : vector<16x64xf32> to vector<1x64xf32>
    %142 = vector.broadcast %141 : vector<1x64xf32> to vector<8x64xf32>
    %143 = arith.mulf %142, %20 : vector<8x64xf32>
    %144 = math.exp %143 : vector<8x64xf32>
    %145 = vector.extract_strided_slice %121 {offsets = [0, 1], sizes = [8, 1], strides = [1, 1]} : vector<8x16xf32> to vector<8x1xf32>
    %146 = vector.extract_strided_slice %123 {offsets = [1, 0], sizes = [1, 64], strides = [1, 1]} : vector<16x64xf32> to vector<1x64xf32>
    %147 = vector.broadcast %145 : vector<8x1xf32> to vector<8x64xf32>
    %148 = vector.broadcast %146 : vector<1x64xf32> to vector<8x64xf32>
    %149 = arith.mulf %147, %148 : vector<8x64xf32>
    %150 = arith.mulf %144, %135 : vector<8x64xf32>
    %151 = arith.addf %150, %149 : vector<8x64xf32>
    %152 = vector.extract_strided_slice %122 {offsets = [0, 1], sizes = [8, 1], strides = [1, 1]} : vector<8x16xf32> to vector<8x1xf32>
    %153 = vector.broadcast %152 : vector<8x1xf32> to vector<8x64xf32>
    %154 = arith.mulf %151, %153 : vector<8x64xf32>
    %cst_39 = arith.constant dense<0.000000e+00> : vector<64xf32>
    %155 = vector.multi_reduction <add>, %154, %cst_39 [0] : vector<8x64xf32> to vector<64xf32>
    %156 = vector.shape_cast %155 : vector<64xf32> to vector<1x64xf32>
    %157 = vector.extract_strided_slice %119 {offsets = [2, 0], sizes = [1, 64], strides = [1, 1]} : vector<16x64xf32> to vector<1x64xf32>
    %158 = vector.broadcast %157 : vector<1x64xf32> to vector<8x64xf32>
    %159 = arith.mulf %158, %20 : vector<8x64xf32>
    %160 = math.exp %159 : vector<8x64xf32>
    %161 = vector.extract_strided_slice %121 {offsets = [0, 2], sizes = [8, 1], strides = [1, 1]} : vector<8x16xf32> to vector<8x1xf32>
    %162 = vector.extract_strided_slice %123 {offsets = [2, 0], sizes = [1, 64], strides = [1, 1]} : vector<16x64xf32> to vector<1x64xf32>
    %163 = vector.broadcast %161 : vector<8x1xf32> to vector<8x64xf32>
    %164 = vector.broadcast %162 : vector<1x64xf32> to vector<8x64xf32>
    %165 = arith.mulf %163, %164 : vector<8x64xf32>
    %166 = arith.mulf %160, %151 : vector<8x64xf32>
    %167 = arith.addf %166, %165 : vector<8x64xf32>
    %168 = vector.extract_strided_slice %122 {offsets = [0, 2], sizes = [8, 1], strides = [1, 1]} : vector<8x16xf32> to vector<8x1xf32>
    %169 = vector.broadcast %168 : vector<8x1xf32> to vector<8x64xf32>
    %170 = arith.mulf %167, %169 : vector<8x64xf32>
    %cst_40 = arith.constant dense<0.000000e+00> : vector<64xf32>
    %171 = vector.multi_reduction <add>, %170, %cst_40 [0] : vector<8x64xf32> to vector<64xf32>
    %172 = vector.shape_cast %171 : vector<64xf32> to vector<1x64xf32>
    %173 = vector.extract_strided_slice %119 {offsets = [3, 0], sizes = [1, 64], strides = [1, 1]} : vector<16x64xf32> to vector<1x64xf32>
    %174 = vector.broadcast %173 : vector<1x64xf32> to vector<8x64xf32>
    %175 = arith.mulf %174, %20 : vector<8x64xf32>
    %176 = math.exp %175 : vector<8x64xf32>
    %177 = vector.extract_strided_slice %121 {offsets = [0, 3], sizes = [8, 1], strides = [1, 1]} : vector<8x16xf32> to vector<8x1xf32>
    %178 = vector.extract_strided_slice %123 {offsets = [3, 0], sizes = [1, 64], strides = [1, 1]} : vector<16x64xf32> to vector<1x64xf32>
    %179 = vector.broadcast %177 : vector<8x1xf32> to vector<8x64xf32>
    %180 = vector.broadcast %178 : vector<1x64xf32> to vector<8x64xf32>
    %181 = arith.mulf %179, %180 : vector<8x64xf32>
    %182 = arith.mulf %176, %167 : vector<8x64xf32>
    %183 = arith.addf %182, %181 : vector<8x64xf32>
    %184 = vector.extract_strided_slice %122 {offsets = [0, 3], sizes = [8, 1], strides = [1, 1]} : vector<8x16xf32> to vector<8x1xf32>
    %185 = vector.broadcast %184 : vector<8x1xf32> to vector<8x64xf32>
    %186 = arith.mulf %183, %185 : vector<8x64xf32>
    %cst_41 = arith.constant dense<0.000000e+00> : vector<64xf32>
    %187 = vector.multi_reduction <add>, %186, %cst_41 [0] : vector<8x64xf32> to vector<64xf32>
    %188 = vector.shape_cast %187 : vector<64xf32> to vector<1x64xf32>
    %189 = vector.extract_strided_slice %119 {offsets = [4, 0], sizes = [1, 64], strides = [1, 1]} : vector<16x64xf32> to vector<1x64xf32>
    %190 = vector.broadcast %189 : vector<1x64xf32> to vector<8x64xf32>
    %191 = arith.mulf %190, %20 : vector<8x64xf32>
    %192 = math.exp %191 : vector<8x64xf32>
    %193 = vector.extract_strided_slice %121 {offsets = [0, 4], sizes = [8, 1], strides = [1, 1]} : vector<8x16xf32> to vector<8x1xf32>
    %194 = vector.extract_strided_slice %123 {offsets = [4, 0], sizes = [1, 64], strides = [1, 1]} : vector<16x64xf32> to vector<1x64xf32>
    %195 = vector.broadcast %193 : vector<8x1xf32> to vector<8x64xf32>
    %196 = vector.broadcast %194 : vector<1x64xf32> to vector<8x64xf32>
    %197 = arith.mulf %195, %196 : vector<8x64xf32>
    %198 = arith.mulf %192, %183 : vector<8x64xf32>
    %199 = arith.addf %198, %197 : vector<8x64xf32>
    %200 = vector.extract_strided_slice %122 {offsets = [0, 4], sizes = [8, 1], strides = [1, 1]} : vector<8x16xf32> to vector<8x1xf32>
    %201 = vector.broadcast %200 : vector<8x1xf32> to vector<8x64xf32>
    %202 = arith.mulf %199, %201 : vector<8x64xf32>
    %cst_42 = arith.constant dense<0.000000e+00> : vector<64xf32>
    %203 = vector.multi_reduction <add>, %202, %cst_42 [0] : vector<8x64xf32> to vector<64xf32>
    %204 = vector.shape_cast %203 : vector<64xf32> to vector<1x64xf32>
    %205 = vector.extract_strided_slice %119 {offsets = [5, 0], sizes = [1, 64], strides = [1, 1]} : vector<16x64xf32> to vector<1x64xf32>
    %206 = vector.broadcast %205 : vector<1x64xf32> to vector<8x64xf32>
    %207 = arith.mulf %206, %20 : vector<8x64xf32>
    %208 = math.exp %207 : vector<8x64xf32>
    %209 = vector.extract_strided_slice %121 {offsets = [0, 5], sizes = [8, 1], strides = [1, 1]} : vector<8x16xf32> to vector<8x1xf32>
    %210 = vector.extract_strided_slice %123 {offsets = [5, 0], sizes = [1, 64], strides = [1, 1]} : vector<16x64xf32> to vector<1x64xf32>
    %211 = vector.broadcast %209 : vector<8x1xf32> to vector<8x64xf32>
    %212 = vector.broadcast %210 : vector<1x64xf32> to vector<8x64xf32>
    %213 = arith.mulf %211, %212 : vector<8x64xf32>
    %214 = arith.mulf %208, %199 : vector<8x64xf32>
    %215 = arith.addf %214, %213 : vector<8x64xf32>
    %216 = vector.extract_strided_slice %122 {offsets = [0, 5], sizes = [8, 1], strides = [1, 1]} : vector<8x16xf32> to vector<8x1xf32>
    %217 = vector.broadcast %216 : vector<8x1xf32> to vector<8x64xf32>
    %218 = arith.mulf %215, %217 : vector<8x64xf32>
    %cst_43 = arith.constant dense<0.000000e+00> : vector<64xf32>
    %219 = vector.multi_reduction <add>, %218, %cst_43 [0] : vector<8x64xf32> to vector<64xf32>
    %220 = vector.shape_cast %219 : vector<64xf32> to vector<1x64xf32>
    %221 = vector.extract_strided_slice %119 {offsets = [6, 0], sizes = [1, 64], strides = [1, 1]} : vector<16x64xf32> to vector<1x64xf32>
    %222 = vector.broadcast %221 : vector<1x64xf32> to vector<8x64xf32>
    %223 = arith.mulf %222, %20 : vector<8x64xf32>
    %224 = math.exp %223 : vector<8x64xf32>
    %225 = vector.extract_strided_slice %121 {offsets = [0, 6], sizes = [8, 1], strides = [1, 1]} : vector<8x16xf32> to vector<8x1xf32>
    %226 = vector.extract_strided_slice %123 {offsets = [6, 0], sizes = [1, 64], strides = [1, 1]} : vector<16x64xf32> to vector<1x64xf32>
    %227 = vector.broadcast %225 : vector<8x1xf32> to vector<8x64xf32>
    %228 = vector.broadcast %226 : vector<1x64xf32> to vector<8x64xf32>
    %229 = arith.mulf %227, %228 : vector<8x64xf32>
    %230 = arith.mulf %224, %215 : vector<8x64xf32>
    %231 = arith.addf %230, %229 : vector<8x64xf32>
    %232 = vector.extract_strided_slice %122 {offsets = [0, 6], sizes = [8, 1], strides = [1, 1]} : vector<8x16xf32> to vector<8x1xf32>
    %233 = vector.broadcast %232 : vector<8x1xf32> to vector<8x64xf32>
    %234 = arith.mulf %231, %233 : vector<8x64xf32>
    %cst_44 = arith.constant dense<0.000000e+00> : vector<64xf32>
    %235 = vector.multi_reduction <add>, %234, %cst_44 [0] : vector<8x64xf32> to vector<64xf32>
    %236 = vector.shape_cast %235 : vector<64xf32> to vector<1x64xf32>
    %237 = vector.extract_strided_slice %119 {offsets = [7, 0], sizes = [1, 64], strides = [1, 1]} : vector<16x64xf32> to vector<1x64xf32>
    %238 = vector.broadcast %237 : vector<1x64xf32> to vector<8x64xf32>
    %239 = arith.mulf %238, %20 : vector<8x64xf32>
    %240 = math.exp %239 : vector<8x64xf32>
    %241 = vector.extract_strided_slice %121 {offsets = [0, 7], sizes = [8, 1], strides = [1, 1]} : vector<8x16xf32> to vector<8x1xf32>
    %242 = vector.extract_strided_slice %123 {offsets = [7, 0], sizes = [1, 64], strides = [1, 1]} : vector<16x64xf32> to vector<1x64xf32>
    %243 = vector.broadcast %241 : vector<8x1xf32> to vector<8x64xf32>
    %244 = vector.broadcast %242 : vector<1x64xf32> to vector<8x64xf32>
    %245 = arith.mulf %243, %244 : vector<8x64xf32>
    %246 = arith.mulf %240, %231 : vector<8x64xf32>
    %247 = arith.addf %246, %245 : vector<8x64xf32>
    %248 = vector.extract_strided_slice %122 {offsets = [0, 7], sizes = [8, 1], strides = [1, 1]} : vector<8x16xf32> to vector<8x1xf32>
    %249 = vector.broadcast %248 : vector<8x1xf32> to vector<8x64xf32>
    %250 = arith.mulf %247, %249 : vector<8x64xf32>
    %cst_45 = arith.constant dense<0.000000e+00> : vector<64xf32>
    %251 = vector.multi_reduction <add>, %250, %cst_45 [0] : vector<8x64xf32> to vector<64xf32>
    %252 = vector.shape_cast %251 : vector<64xf32> to vector<1x64xf32>
    %cst_46 = arith.constant 0.000000e+00 : f32
    %253 = vector.broadcast %cst_46 : f32 to vector<8x64xf32>
    %254 = vector.extract_strided_slice %119 {offsets = [8, 0], sizes = [1, 64], strides = [1, 1]} : vector<16x64xf32> to vector<1x64xf32>
    %255 = vector.broadcast %254 : vector<1x64xf32> to vector<8x64xf32>
    %256 = arith.mulf %255, %20 : vector<8x64xf32>
    %257 = math.exp %256 : vector<8x64xf32>
    %258 = vector.extract_strided_slice %121 {offsets = [0, 8], sizes = [8, 1], strides = [1, 1]} : vector<8x16xf32> to vector<8x1xf32>
    %259 = vector.extract_strided_slice %123 {offsets = [8, 0], sizes = [1, 64], strides = [1, 1]} : vector<16x64xf32> to vector<1x64xf32>
    %260 = vector.broadcast %258 : vector<8x1xf32> to vector<8x64xf32>
    %261 = vector.broadcast %259 : vector<1x64xf32> to vector<8x64xf32>
    %262 = arith.mulf %260, %261 : vector<8x64xf32>
    %263 = arith.mulf %257, %253 : vector<8x64xf32>
    %264 = arith.addf %263, %262 : vector<8x64xf32>
    %265 = vector.extract_strided_slice %122 {offsets = [0, 8], sizes = [8, 1], strides = [1, 1]} : vector<8x16xf32> to vector<8x1xf32>
    %266 = vector.broadcast %265 : vector<8x1xf32> to vector<8x64xf32>
    %267 = arith.mulf %264, %266 : vector<8x64xf32>
    %cst_47 = arith.constant dense<0.000000e+00> : vector<64xf32>
    %268 = vector.multi_reduction <add>, %267, %cst_47 [0] : vector<8x64xf32> to vector<64xf32>
    %269 = vector.shape_cast %268 : vector<64xf32> to vector<1x64xf32>
    %270 = vector.extract_strided_slice %119 {offsets = [9, 0], sizes = [1, 64], strides = [1, 1]} : vector<16x64xf32> to vector<1x64xf32>
    %271 = vector.broadcast %270 : vector<1x64xf32> to vector<8x64xf32>
    %272 = arith.mulf %271, %20 : vector<8x64xf32>
    %273 = math.exp %272 : vector<8x64xf32>
    %274 = vector.extract_strided_slice %121 {offsets = [0, 9], sizes = [8, 1], strides = [1, 1]} : vector<8x16xf32> to vector<8x1xf32>
    %275 = vector.extract_strided_slice %123 {offsets = [9, 0], sizes = [1, 64], strides = [1, 1]} : vector<16x64xf32> to vector<1x64xf32>
    %276 = vector.broadcast %274 : vector<8x1xf32> to vector<8x64xf32>
    %277 = vector.broadcast %275 : vector<1x64xf32> to vector<8x64xf32>
    %278 = arith.mulf %276, %277 : vector<8x64xf32>
    %279 = arith.mulf %273, %264 : vector<8x64xf32>
    %280 = arith.addf %279, %278 : vector<8x64xf32>
    %281 = vector.extract_strided_slice %122 {offsets = [0, 9], sizes = [8, 1], strides = [1, 1]} : vector<8x16xf32> to vector<8x1xf32>
    %282 = vector.broadcast %281 : vector<8x1xf32> to vector<8x64xf32>
    %283 = arith.mulf %280, %282 : vector<8x64xf32>
    %cst_48 = arith.constant dense<0.000000e+00> : vector<64xf32>
    %284 = vector.multi_reduction <add>, %283, %cst_48 [0] : vector<8x64xf32> to vector<64xf32>
    %285 = vector.shape_cast %284 : vector<64xf32> to vector<1x64xf32>
    %286 = vector.extract_strided_slice %119 {offsets = [10, 0], sizes = [1, 64], strides = [1, 1]} : vector<16x64xf32> to vector<1x64xf32>
    %287 = vector.broadcast %286 : vector<1x64xf32> to vector<8x64xf32>
    %288 = arith.mulf %287, %20 : vector<8x64xf32>
    %289 = math.exp %288 : vector<8x64xf32>
    %290 = vector.extract_strided_slice %121 {offsets = [0, 10], sizes = [8, 1], strides = [1, 1]} : vector<8x16xf32> to vector<8x1xf32>
    %291 = vector.extract_strided_slice %123 {offsets = [10, 0], sizes = [1, 64], strides = [1, 1]} : vector<16x64xf32> to vector<1x64xf32>
    %292 = vector.broadcast %290 : vector<8x1xf32> to vector<8x64xf32>
    %293 = vector.broadcast %291 : vector<1x64xf32> to vector<8x64xf32>
    %294 = arith.mulf %292, %293 : vector<8x64xf32>
    %295 = arith.mulf %289, %280 : vector<8x64xf32>
    %296 = arith.addf %295, %294 : vector<8x64xf32>
    %297 = vector.extract_strided_slice %122 {offsets = [0, 10], sizes = [8, 1], strides = [1, 1]} : vector<8x16xf32> to vector<8x1xf32>
    %298 = vector.broadcast %297 : vector<8x1xf32> to vector<8x64xf32>
    %299 = arith.mulf %296, %298 : vector<8x64xf32>
    %cst_49 = arith.constant dense<0.000000e+00> : vector<64xf32>
    %300 = vector.multi_reduction <add>, %299, %cst_49 [0] : vector<8x64xf32> to vector<64xf32>
    %301 = vector.shape_cast %300 : vector<64xf32> to vector<1x64xf32>
    %302 = vector.extract_strided_slice %119 {offsets = [11, 0], sizes = [1, 64], strides = [1, 1]} : vector<16x64xf32> to vector<1x64xf32>
    %303 = vector.broadcast %302 : vector<1x64xf32> to vector<8x64xf32>
    %304 = arith.mulf %303, %20 : vector<8x64xf32>
    %305 = math.exp %304 : vector<8x64xf32>
    %306 = vector.extract_strided_slice %121 {offsets = [0, 11], sizes = [8, 1], strides = [1, 1]} : vector<8x16xf32> to vector<8x1xf32>
    %307 = vector.extract_strided_slice %123 {offsets = [11, 0], sizes = [1, 64], strides = [1, 1]} : vector<16x64xf32> to vector<1x64xf32>
    %308 = vector.broadcast %306 : vector<8x1xf32> to vector<8x64xf32>
    %309 = vector.broadcast %307 : vector<1x64xf32> to vector<8x64xf32>
    %310 = arith.mulf %308, %309 : vector<8x64xf32>
    %311 = arith.mulf %305, %296 : vector<8x64xf32>
    %312 = arith.addf %311, %310 : vector<8x64xf32>
    %313 = vector.extract_strided_slice %122 {offsets = [0, 11], sizes = [8, 1], strides = [1, 1]} : vector<8x16xf32> to vector<8x1xf32>
    %314 = vector.broadcast %313 : vector<8x1xf32> to vector<8x64xf32>
    %315 = arith.mulf %312, %314 : vector<8x64xf32>
    %cst_50 = arith.constant dense<0.000000e+00> : vector<64xf32>
    %316 = vector.multi_reduction <add>, %315, %cst_50 [0] : vector<8x64xf32> to vector<64xf32>
    %317 = vector.shape_cast %316 : vector<64xf32> to vector<1x64xf32>
    %318 = vector.extract_strided_slice %119 {offsets = [12, 0], sizes = [1, 64], strides = [1, 1]} : vector<16x64xf32> to vector<1x64xf32>
    %319 = vector.broadcast %318 : vector<1x64xf32> to vector<8x64xf32>
    %320 = arith.mulf %319, %20 : vector<8x64xf32>
    %321 = math.exp %320 : vector<8x64xf32>
    %322 = vector.extract_strided_slice %121 {offsets = [0, 12], sizes = [8, 1], strides = [1, 1]} : vector<8x16xf32> to vector<8x1xf32>
    %323 = vector.extract_strided_slice %123 {offsets = [12, 0], sizes = [1, 64], strides = [1, 1]} : vector<16x64xf32> to vector<1x64xf32>
    %324 = vector.broadcast %322 : vector<8x1xf32> to vector<8x64xf32>
    %325 = vector.broadcast %323 : vector<1x64xf32> to vector<8x64xf32>
    %326 = arith.mulf %324, %325 : vector<8x64xf32>
    %327 = arith.mulf %321, %312 : vector<8x64xf32>
    %328 = arith.addf %327, %326 : vector<8x64xf32>
    %329 = vector.extract_strided_slice %122 {offsets = [0, 12], sizes = [8, 1], strides = [1, 1]} : vector<8x16xf32> to vector<8x1xf32>
    %330 = vector.broadcast %329 : vector<8x1xf32> to vector<8x64xf32>
    %331 = arith.mulf %328, %330 : vector<8x64xf32>
    %cst_51 = arith.constant dense<0.000000e+00> : vector<64xf32>
    %332 = vector.multi_reduction <add>, %331, %cst_51 [0] : vector<8x64xf32> to vector<64xf32>
    %333 = vector.shape_cast %332 : vector<64xf32> to vector<1x64xf32>
    %334 = vector.extract_strided_slice %119 {offsets = [13, 0], sizes = [1, 64], strides = [1, 1]} : vector<16x64xf32> to vector<1x64xf32>
    %335 = vector.broadcast %334 : vector<1x64xf32> to vector<8x64xf32>
    %336 = arith.mulf %335, %20 : vector<8x64xf32>
    %337 = math.exp %336 : vector<8x64xf32>
    %338 = vector.extract_strided_slice %121 {offsets = [0, 13], sizes = [8, 1], strides = [1, 1]} : vector<8x16xf32> to vector<8x1xf32>
    %339 = vector.extract_strided_slice %123 {offsets = [13, 0], sizes = [1, 64], strides = [1, 1]} : vector<16x64xf32> to vector<1x64xf32>
    %340 = vector.broadcast %338 : vector<8x1xf32> to vector<8x64xf32>
    %341 = vector.broadcast %339 : vector<1x64xf32> to vector<8x64xf32>
    %342 = arith.mulf %340, %341 : vector<8x64xf32>
    %343 = arith.mulf %337, %328 : vector<8x64xf32>
    %344 = arith.addf %343, %342 : vector<8x64xf32>
    %345 = vector.extract_strided_slice %122 {offsets = [0, 13], sizes = [8, 1], strides = [1, 1]} : vector<8x16xf32> to vector<8x1xf32>
    %346 = vector.broadcast %345 : vector<8x1xf32> to vector<8x64xf32>
    %347 = arith.mulf %344, %346 : vector<8x64xf32>
    %cst_52 = arith.constant dense<0.000000e+00> : vector<64xf32>
    %348 = vector.multi_reduction <add>, %347, %cst_52 [0] : vector<8x64xf32> to vector<64xf32>
    %349 = vector.shape_cast %348 : vector<64xf32> to vector<1x64xf32>
    %350 = vector.extract_strided_slice %119 {offsets = [14, 0], sizes = [1, 64], strides = [1, 1]} : vector<16x64xf32> to vector<1x64xf32>
    %351 = vector.broadcast %350 : vector<1x64xf32> to vector<8x64xf32>
    %352 = arith.mulf %351, %20 : vector<8x64xf32>
    %353 = math.exp %352 : vector<8x64xf32>
    %354 = vector.extract_strided_slice %121 {offsets = [0, 14], sizes = [8, 1], strides = [1, 1]} : vector<8x16xf32> to vector<8x1xf32>
    %355 = vector.extract_strided_slice %123 {offsets = [14, 0], sizes = [1, 64], strides = [1, 1]} : vector<16x64xf32> to vector<1x64xf32>
    %356 = vector.broadcast %354 : vector<8x1xf32> to vector<8x64xf32>
    %357 = vector.broadcast %355 : vector<1x64xf32> to vector<8x64xf32>
    %358 = arith.mulf %356, %357 : vector<8x64xf32>
    %359 = arith.mulf %353, %344 : vector<8x64xf32>
    %360 = arith.addf %359, %358 : vector<8x64xf32>
    %361 = vector.extract_strided_slice %122 {offsets = [0, 14], sizes = [8, 1], strides = [1, 1]} : vector<8x16xf32> to vector<8x1xf32>
    %362 = vector.broadcast %361 : vector<8x1xf32> to vector<8x64xf32>
    %363 = arith.mulf %360, %362 : vector<8x64xf32>
    %cst_53 = arith.constant dense<0.000000e+00> : vector<64xf32>
    %364 = vector.multi_reduction <add>, %363, %cst_53 [0] : vector<8x64xf32> to vector<64xf32>
    %365 = vector.shape_cast %364 : vector<64xf32> to vector<1x64xf32>
    %366 = vector.extract_strided_slice %119 {offsets = [15, 0], sizes = [1, 64], strides = [1, 1]} : vector<16x64xf32> to vector<1x64xf32>
    %367 = vector.broadcast %366 : vector<1x64xf32> to vector<8x64xf32>
    %368 = arith.mulf %367, %20 : vector<8x64xf32>
    %369 = math.exp %368 : vector<8x64xf32>
    %370 = vector.extract_strided_slice %121 {offsets = [0, 15], sizes = [8, 1], strides = [1, 1]} : vector<8x16xf32> to vector<8x1xf32>
    %371 = vector.extract_strided_slice %123 {offsets = [15, 0], sizes = [1, 64], strides = [1, 1]} : vector<16x64xf32> to vector<1x64xf32>
    %372 = vector.broadcast %370 : vector<8x1xf32> to vector<8x64xf32>
    %373 = vector.broadcast %371 : vector<1x64xf32> to vector<8x64xf32>
    %374 = arith.mulf %372, %373 : vector<8x64xf32>
    %375 = arith.mulf %369, %360 : vector<8x64xf32>
    %376 = arith.addf %375, %374 : vector<8x64xf32>
    %377 = vector.extract_strided_slice %122 {offsets = [0, 15], sizes = [8, 1], strides = [1, 1]} : vector<8x16xf32> to vector<8x1xf32>
    %378 = vector.broadcast %377 : vector<8x1xf32> to vector<8x64xf32>
    %379 = arith.mulf %376, %378 : vector<8x64xf32>
    %cst_54 = arith.constant dense<0.000000e+00> : vector<64xf32>
    %380 = vector.multi_reduction <add>, %379, %cst_54 [0] : vector<8x64xf32> to vector<64xf32>
    %381 = vector.shape_cast %380 : vector<64xf32> to vector<1x64xf32>
    %382 = tpu.concatenate %140, %156, %172, %188, %204, %220, %236, %252, %269, %285, %301, %317, %333, %349, %365, %381 in 0 : vector<1x64xf32>, vector<1x64xf32>, vector<1x64xf32>, vector<1x64xf32>, vector<1x64xf32>, vector<1x64xf32>, vector<1x64xf32>, vector<1x64xf32>, vector<1x64xf32>, vector<1x64xf32>, vector<1x64xf32>, vector<1x64xf32>, vector<1x64xf32>, vector<1x64xf32>, vector<1x64xf32>, vector<1x64xf32> -> vector<16x64xf32>
    %383 = vector.broadcast %17 : vector<1x64xf32> to vector<16x64xf32>
    %384 = arith.mulf %383, %106 : vector<16x64xf32>
    %385 = arith.addf %382, %384 : vector<16x64xf32>
    %386 = arith.negf %69 : vector<16x64xf32>
    %387 = math.exp %386 : vector<16x64xf32>
    %cst_55 = arith.constant 1.000000e+00 : f32
    %388 = vector.broadcast %cst_55 : f32 to vector<16x64xf32>
    %389 = arith.addf %388, %387 : vector<16x64xf32>
    %390 = arith.divf %388, %389 : vector<16x64xf32>
    %391 = arith.mulf %69, %390 : vector<16x64xf32>
    %392 = arith.mulf %385, %391 : vector<16x64xf32>
    %cst_56 = arith.constant dense<0.000000e+00> : vector<16x32xf32>
    %393 = tpu.matmul %392, %5, %cst_56 {dimension_numbers = #tpu.dot_dimension_numbers<[1], [0], [0], [1], [0, 0, 1, 1], [], []>} : vector<16x64xf32>, vector<64x32xf32>, vector<16x32xf32> -> vector<16x32xf32>
    %394 = vector.broadcast %18 : vector<1x32xf32> to vector<16x32xf32>
    %395 = arith.addf %393, %394 : vector<16x32xf32>
    %cst_57 = arith.constant dense<0.000000e+00> : vector<16x32xf32>
    %396 = tpu.matmul %9, %395, %cst_57 {dimension_numbers = #tpu.dot_dimension_numbers<[1], [0], [0], [1], [0, 0, 1, 1], [], []>} : vector<16x16xf32>, vector<16x32xf32>, vector<16x32xf32> -> vector<16x32xf32>
    %397 = arith.mulf %39, %396 : vector<16x32xf32>
    %398 = arith.addf %0, %397 : vector<16x32xf32>
    %c0_58 = arith.constant 0 : index
    %c0_59 = arith.constant 0 : index
    %399 = vector.load %arg5[%c0_58, %c0_59] : memref<16x32xf32, #tpu.memory_space<vmem>>, vector<16x32xf32>
    tpu.vector_store %arg5[%c0_58, %c0_59], %398 {strides = array<i32>} : memref<16x32xf32, #tpu.memory_space<vmem>>, vector<16x32xf32>,
    return
  }
  func.func @transform_0(%arg0: i32) -> (i32, i32) {
    %c0_i32 = arith.constant 0 : i32
    %c0_i32_0 = arith.constant 0 : i32
    %c0_i32_1 = arith.constant 0 : i32
    return %c0_i32, %c0_i32_0 : i32, i32
  }
  func.func @transform_1(%arg0: i32) -> (i32, i32) {
    %c0_i32 = arith.constant 0 : i32
    %c0_i32_0 = arith.constant 0 : i32
    %c0_i32_1 = arith.constant 0 : i32
    return %c0_i32, %c0_i32_0 : i32, i32
  }
  func.func @transform_2(%arg0: i32) -> (i32, i32) {
    %c0_i32 = arith.constant 0 : i32
    %c0_i32_0 = arith.constant 0 : i32
    %c0_i32_1 = arith.constant 0 : i32
    return %c0_i32, %c0_i32_0 : i32, i32
  }
  func.func @transform_3(%arg0: i32) -> (i32, i32) {
    %c0_i32 = arith.constant 0 : i32
    %c0_i32_0 = arith.constant 0 : i32
    %c0_i32_1 = arith.constant 0 : i32
    return %c0_i32, %c0_i32_0 : i32, i32
  }
  func.func @transform_4(%arg0: i32) -> (i32, i32) {
    %c0_i32 = arith.constant 0 : i32
    %c0_i32_0 = arith.constant 0 : i32
    %c0_i32_1 = arith.constant 0 : i32
    return %c0_i32, %c0_i32_0 : i32, i32
  }
}

</mosaic_0001>

<llo_original>
// kernel: tpu_custom_call.1
$region0: #{tpu_custom_call.1}
  #allocation0 [shape = 'u32[]', space=smem, size = 0x4, offset = 0x4, fixed_abs, tag = 'smem constant byte address 0x4 - core index']
  #allocation1 [shape = 'u32[72,128]{1,0:T(1,128)}', space=vmem, size = 0x9000, scoped, tag = 'internal scratch']
  %s0 = inlined_call_operand.hbm [shape: f32[16,32], index: 0, kind: input, shape index: {}]
  %s1 = inlined_call_operand.hbm [shape: f32[2,64], index: 1, kind: input, shape index: {}]
  %s2 = inlined_call_operand.hbm [shape: f32[64,768], index: 2, kind: input, shape index: {}]
  %s3 = inlined_call_operand.hbm [shape: f32[24,128], index: 3, kind: input, shape index: {}]
  %s4 = inlined_call_operand.hbm [shape: f32[16,32], index: 4, kind: output, shape index: {}]
  %s5 = sld [smem:[#allocation0]]
  $region42: #{tpu_custom_call.1} parent=0
    _
  %s7 = ssub.s32 1, %s5
  %s8 = scalar_select 0, %s7, %s5
  $region1: #{tpu_custom_call.1} parent=0
    #allocation2 [shape = 'u8[8192]{0}', space=vmem, size = 0x2000, scoped, tag = 'input window, operand 0, single buffered']
    #allocation3 [shape = 's32[1]{0}', space=sflag, size = 0x4, scoped, tag = 'scoped memory for tpu_custom_call.1']
    #allocation4 [shape = 's32[1]{0}', space=sflag, size = 0x4, scoped, tag = 'scoped memory for tpu_custom_call.1']
    #allocation5 [shape = 'u8[1024]{0}', space=vmem, size = 0x400, scoped, tag = 'input window, operand 1, single buffered']
    #allocation6 [shape = 's32[1]{0}', space=sflag, size = 0x4, scoped, tag = 'scoped memory for tpu_custom_call.1']
    #allocation7 [shape = 'u8[196608]{0}', space=vmem, size = 0x30000, scoped, tag = 'input window, operand 2, single buffered']
    #allocation8 [shape = 'u8[12288]{0}', space=vmem, size = 0x3000, scoped, tag = 'input window, operand 3, single buffered']
    #allocation9 [shape = 's32[1]{0}', space=sflag, size = 0x4, scoped, tag = 'scoped memory for tpu_custom_call.1']
    #allocation10 [shape = 'u8[8192]{0}', space=vmem, size = 0x2000, scoped, tag = 'output window, operand 0, single buffered']
    %9 = vsyncpa [#allocation3], 0
    %10 = vsyncpa [#allocation6], 0
    %11 = vsyncpa [#allocation9], 0
    %12 = vsyncpa [#allocation4], 0
    // Predicated region
    $region2: #{tpu_custom_call.1} parent=1 // pred_check
      _
    $region3: #{tpu_custom_call.1} parent=1 // pred_check_branch
      %14 = sbr.rel (0) target = $region5
    $region4: #{tpu_custom_call.1} parent=1 // pred_region
      %16 = vsyncadd [#allocation3], 0
      %s17 = sshll.u32 %s0, 4
      %s18 = int_to_ptr.hbm [resolvable:$true] %s17
      %s19 = sshll.u32 [#allocation2], 4
      %s20 = int_to_ptr.vmem [resolvable:$true] %s19
      %25 = dma.hbm_to_vmem [thread:$0]  %s18, 256, %s20, [#allocation3], 128, 128, 8
    $region5: #{tpu_custom_call.1} parent=1 // pred_fallthru
      _
    // Predicated region
    $region6: #{tpu_custom_call.1} parent=1 // pred_check
      _
    $region7: #{tpu_custom_call.1} parent=1 // pred_check_branch
      %27 = sbr.rel (0) target = $region9
    $region8: #{tpu_custom_call.1} parent=1 // pred_region
      %29 = vsyncadd [#allocation6], 0
      %s31 = sshll.u32 %s1, 4
      %s32 = int_to_ptr.hbm [resolvable:$true] %s31
      %s33 = sshll.u32 [#allocation5], 4
      %s34 = int_to_ptr.vmem [resolvable:$true] %s33
      %36 = dma.hbm_to_vmem [thread:$0]  %s32, 32, %s34, [#allocation6]
    $region9: #{tpu_custom_call.1} parent=1 // pred_fallthru
      _
    // Predicated region
    $region10: #{tpu_custom_call.1} parent=1 // pred_check
      _
    $region11: #{tpu_custom_call.1} parent=1 // pred_check_branch
      %38 = sbr.rel (0) target = $region13
    $region12: #{tpu_custom_call.1} parent=1 // pred_region
      %40 = vsyncadd [#allocation6], 0
      %s41 = sshll.u32 %s2, 4
      %s42 = int_to_ptr.hbm [resolvable:$true] %s41
      %s43 = sshll.u32 [#allocation7], 4
      %s44 = int_to_ptr.vmem [resolvable:$true] %s43
      %49 = dma.hbm_to_vmem [thread:$0]  %s42, 6144, %s44, [#allocation6], 768, 768, 48
    $region13: #{tpu_custom_call.1} parent=1 // pred_fallthru
      _
    // Predicated region
    $region14: #{tpu_custom_call.1} parent=1 // pred_check
      _
    $region15: #{tpu_custom_call.1} parent=1 // pred_check_branch
      %51 = sbr.rel (0) target = $region17
    $region16: #{tpu_custom_call.1} parent=1 // pred_region
      %53 = vsyncadd [#allocation9], 0
      %s54 = sshll.u32 %s3, 4
      %s55 = int_to_ptr.hbm [resolvable:$true] %s54
      %s56 = sshll.u32 [#allocation8], 4
      %s57 = int_to_ptr.vmem [resolvable:$true] %s56
      %62 = dma.hbm_to_vmem [thread:$0]  %s55, 384, %s57, [#allocation9], 128, 128, 8
    $region17: #{tpu_custom_call.1} parent=1 // pred_fallthru
      _
    // Predicated region
    $region18: #{tpu_custom_call.1} parent=1 // pred_check
      _
    $region19: #{tpu_custom_call.1} parent=1 // pred_check_branch
      %64 = sbr.rel (0) target = $region21
    $region20: #{tpu_custom_call.1} parent=1 // pred_region
      %66 = dma.done [#allocation3], 256
    $region21: #{tpu_custom_call.1} parent=1 // pred_fallthru
      _
    // Predicated region
    $region22: #{tpu_custom_call.1} parent=1 // pred_check
      _
    $region23: #{tpu_custom_call.1} parent=1 // pred_check_branch
      %68 = sbr.rel (0) target = $region25
    $region24: #{tpu_custom_call.1} parent=1 // pred_region
      %70 = dma.done [#allocation6], 32
    $region25: #{tpu_custom_call.1} parent=1 // pred_fallthru
      _
    // Predicated region
    $region26: #{tpu_custom_call.1} parent=1 // pred_check
      _
    $region27: #{tpu_custom_call.1} parent=1 // pred_check_branch
      %72 = sbr.rel (0) target = $region29
    $region28: #{tpu_custom_call.1} parent=1 // pred_region
      %74 = dma.done [#allocation6], 6144
    $region29: #{tpu_custom_call.1} parent=1 // pred_fallthru
      _
    // Predicated region
    $region30: #{tpu_custom_call.1} parent=1 // pred_check
      _
    $region31: #{tpu_custom_call.1} parent=1 // pred_check_branch
      %76 = sbr.rel (0) target = $region33
    $region32: #{tpu_custom_call.1} parent=1 // pred_region
      %78 = dma.done [#allocation9], 384
    $region33: #{tpu_custom_call.1} parent=1 // pred_fallthru
      _
    %v79 = vld [vmem:[#allocation2] sm:$0xff]
    %v80 = vld [vmem:[#allocation2 + $0x8] sm:$0xff]
    %v81 = vld [vmem:[#allocation5] sm:$0x3]
    %v82 = vld [vmem:[#allocation7] sm:$0xff]
    %v83 = vld [vmem:[#allocation7 + $0x30] sm:$0xff]
    %v84 = vld [vmem:[#allocation7 + $0x60] sm:$0xff]
    %v85 = vld [vmem:[#allocation7 + $0x90] sm:$0xff]
    %v86 = vld [vmem:[#allocation7 + $0xc0] sm:$0xff]
    %v87 = vld [vmem:[#allocation7 + $0xf0] sm:$0xff]
    %v88 = vld [vmem:[#allocation7 + $0x120] sm:$0xff]
    %v89 = vld [vmem:[#allocation7 + $0x150] sm:$0xff]
    %v90 = vld [vmem:[#allocation7 + $0x8] sm:$0xff]
    %v91 = vld [vmem:[#allocation7 + $0x38] sm:$0xff]
    %v92 = vld [vmem:[#allocation7 + $0x68] sm:$0xff]
    %v93 = vld [vmem:[#allocation7 + $0x98] sm:$0xff]
    %v94 = vld [vmem:[#allocation7 + $0x10] sm:$0xff]
    %v95 = vld [vmem:[#allocation7 + $0x40] sm:$0xff]
    %v96 = vld [vmem:[#allocation7 + $0x70] sm:$0xff]
    %v97 = vld [vmem:[#allocation7 + $0xa0] sm:$0xff]
    %v98 = vld [vmem:[#allocation7 + $0xd0] sm:$0xff]
    %v99 = vld [vmem:[#allocation7 + $0x100] sm:$0xff]
    %v100 = vld [vmem:[#allocation7 + $0x130] sm:$0xff]
    %v101 = vld [vmem:[#allocation7 + $0x160] sm:$0xff]
    %v102 = vld [vmem:[#allocation7 + $0x18] sm:$0xff]
    %v103 = vld [vmem:[#allocation7 + $0x48] sm:$0xff]
    %v104 = vld [vmem:[#allocation7 + $0x78] sm:$0xff]
    %v105 = vld [vmem:[#allocation7 + $0xa8] sm:$0xff]
    %v106 = vld [vmem:[#allocation7 + $0xd8] sm:$0xff]
    %v107 = vld [vmem:[#allocation7 + $0x108] sm:$0xff]
    %v108 = vld [vmem:[#allocation7 + $0x138] sm:$0xff]
    %v109 = vld [vmem:[#allocation7 + $0x168] sm:$0xff]
    %v110 = vld [vmem:[#allocation7 + $0x20] sm:$0xff]
    %v111 = vld [vmem:[#allocation7 + $0x50] sm:$0xff]
    %v112 = vld [vmem:[#allocation7 + $0x28] sm:$0xff]
    %v113 = vld [vmem:[#allocation7 + $0x58] sm:$0xff]
    %v114 = vld [vmem:[#allocation8] sm:$0x1]
    %v115 = vld [vmem:[#allocation8 + $0x1] sm:$0x1]
    %v116 = vld [vmem:[#allocation8 + $0x2] sm:$0x1]
    %v117 = vld [vmem:[#allocation8 + $0x3] sm:$0x1]
    %v118 = vld [vmem:[#allocation8 + $0x4] sm:$0x1]
    %v119 = vld [vmem:[#allocation8 + $0x5] sm:$0x1]
    %v120 = vld [vmem:[#allocation8 + $0x6] sm:$0x1]
    %v121 = vld [vmem:[#allocation8 + $0x7] sm:$0x1]
    %v122 = vld [vmem:[#allocation8 + $0x8] sm:$0xf]
    %v123 = vld [vmem:[#allocation8 + $0xc] sm:$0xff]
    %v124 = vxor.u32 %v81, 2147483648
    %v125 = vmul.f32 %v124, 1.442695
    %v126 = vpow.pop %v125
    %v127 = vadd.f32 %v126, 1.0
    %v128 = vrcp.pop %v127
    %v129 = vmul.f32 %v127, %v128
    %v130 = vsub.f32 1.0, %v129
    %v131 = vmul.f32 %v128, %v130
    %v132 = vadd.f32 %v128, %v131
    %vm133 = vweird.f32 %v127
    %vm134 = vweird.f32 %v128
    %vm135 = vmor %vm133, %vm134
    %v136 = vsel %vm135, %v128, %v132
    %v137 = vand.u32 2147483647, %v127
    %vm138 = vcmp.eq.f32.partialorder %v137, 8.507059e+37
    %v139 = vand.u32 %v127, 2147483648
    %v140 = vor.u32 1.1754944e-38, %v139
    %v141 = vsel %vm138, %v140, %v136
    %v142 = vmul.f32 1.0, %v141
    %v143 = vmul.f32 %v81, %v142
    %v144 = vperm.slane %v116, 0
    %vm145 = vcmask 523264
    %v147 = vsel %vm145, %v143, 0
    %149 = vmatpush.msra.mxu0 0.0
    %150 = vmatpush.msra.mxu0 0.0
    %151 = vmatpush.msra.mxu0 0.0
    %152 = vmatpush.msra.mxu0 0.0
    %153 = vmatpush.msra.mxu0 0.0
    %154 = vmatpush.msra.mxu0 0.0
    %155 = vmatpush.msra.mxu0 0.0
    %156 = vmatpush.msra.mxu0 0.0
    %157 = vmatpush.msra.mxu0 %v89
    %158 = vmatpush.msra.mxu0 %v88
    %159 = vmatpush.msra.mxu0 %v87
    %160 = vmatpush.msra.mxu0 %v86
    %161 = vmatpush.msra.mxu0 %v85
    %162 = vmatpush.msra.mxu0 %v84
    %163 = vmatpush.msra.mxu0 %v83
    %164 = vmatpush.msra.mxu0 %v82
    %165 = vmatmul.f32.gmra.mxu0 %v147
    %v166 = vpop.f32.mrf.mxu0
    %v167 = vadd.f32 %v144, %v166
    %168 = vdwg.mxu0
    %v169 = vperm.slane %v167, 0
    %v170 = vperm.slane %v167, 1
    %vm171 = vcmask 261120
    %v172 = vsel %vm171, %v79, 0.0
    %173 = vadd.xlane.f32.xlu0 %v172
    %v174 = vpop.xlane.xlu0 %173
    %v175 = vsel %vm171, %v80, 0.0
    %176 = vadd.xlane.f32.xlu0 %v175
    %v177 = vpop.xlane.xlu0 %176
    %v178 = vrcp.pop 32.0
    %v179 = vmul.f32 32.0, %v178
    %v180 = vsub.f32 1.0, %v179
    %v181 = vmul.f32 %v178, %v180
    %v182 = vadd.f32 %v178, %v181
    %vm183 = vweird.f32 %v178
    %v184 = vsel %vm183, %v178, %v182
    %v185 = vmul.f32 %v174, %v184
    %v186 = vmul.f32 %v177, %v184
    %v187 = vsub.f32 %v79, %v185
    %v188 = vsub.f32 %v80, %v186
    %v189 = vmul.f32 %v187, %v187
    %v190 = vmul.f32 %v188, %v188
    %v191 = vsel %vm171, %v189, 0.0
    %192 = vadd.xlane.f32.xlu0 %v191
    %v193 = vpop.xlane.xlu0 %192
    %v194 = vsel %vm171, %v190, 0.0
    %195 = vadd.xlane.f32.xlu0 %v194
    %v196 = vpop.xlane.xlu0 %195
    %v197 = vmul.f32 %v193, %v184
    %v198 = vmul.f32 %v196, %v184
    %v199 = vadd.f32 %v197, 1e-05
    %v200 = vadd.f32 %v198, 1e-05
    %v201 = vrsqrt.pop %v199
    %v202 = vmul.f32 %v201, %v199
    %v203 = vmul.f32 %v202, %v201
    %v204 = vmul.f32 0.5, %v203
    %v205 = vsub.f32 1.5, %v204
    %v206 = vmul.f32 %v201, %v205
    %vm207 = vweird.f32 %v199
    %vm208 = vweird.f32 %v201
    %vm209 = vmor %vm207, %vm208
    %v210 = vsel %vm209, %v201, %v206
    %v211 = vrsqrt.pop %v200
    %v212 = vmul.f32 %v211, %v200
    %v213 = vmul.f32 %v212, %v211
    %v214 = vmul.f32 0.5, %v213
    %v215 = vsub.f32 1.5, %v214
    %v216 = vmul.f32 %v211, %v215
    %vm217 = vweird.f32 %v200
    %vm218 = vweird.f32 %v211
    %vm219 = vmor %vm217, %vm218
    %v220 = vsel %vm219, %v211, %v216
    %v221 = vmul.f32 %v187, %v210
    %v222 = vmul.f32 %v188, %v220
    %v223 = vperm.slane %v114, 0
    %v224 = vmul.f32 %v221, %v223
    %v225 = vmul.f32 %v222, %v223
    %v226 = vperm.slane %v115, 0
    %v227 = vadd.f32 %v224, %v226
    %v228 = vadd.f32 %v225, %v226
    %v229 = vadd.f32 %v169, 1.0
    %v230 = vadd.f32 %v170, 1.0
    %233 = vrot.lane.b32.xlu0 %v229, 96
    %v234 = vpop.permute.xlu0 %233
    %235 = vrot.lane.b32.xlu0 %v230, 96
    %v236 = vpop.permute.xlu0 %235
    %v239 = vmul.f32 %v227, %v234
    %v240 = vmul.f32 %v228, %v236
    %v241 = vadd.f32 %v239, %v169
    %v242 = vadd.f32 %v240, %v170
    %vm243 = vcmask 130048
    %v245 = vsel %vm243, %v112, 0
    %v248 = vsel %vm243, %v113, 0
    %250 = vmatpush.msra.mxu0 0.0
    %251 = vmatpush.msra.mxu0 0.0
    %252 = vmatpush.msra.mxu0 0.0
    %253 = vmatpush.msra.mxu0 0.0
    %254 = vmatpush.msra.mxu0 0.0
    %255 = vmatpush.msra.mxu0 0.0
    %256 = vmatpush.msra.mxu0 0.0
    %257 = vmatpush.msra.mxu0 0.0
    %258 = vmatpush.msra.mxu0 0.0
    %259 = vmatpush.msra.mxu0 0.0
    %260 = vmatpush.msra.mxu0 0.0
    %261 = vmatpush.msra.mxu0 0.0
    %262 = vmatpush.msra.mxu0 0.0
    %263 = vmatpush.msra.mxu0 0.0
    %264 = vmatpush.msra.mxu0 %v242
    %265 = vmatpush.msra.mxu0 %v241
    %266 = vmatmul.f32.gmra.mxu0 %v245
    %v267 = vpop.f32.mrf.mxu0
    %v268 = vadd.f32 0.0, %v267
    %269 = vmatmul.f32.gmra.mxu0 %v248
    %v270 = vpop.f32.mrf.mxu0
    %v271 = vadd.f32 0.0, %v270
    %272 = vdwg.mxu0
    %v273 = vperm.slane %v117, 0
    %v275 = vsel %vm171, %v268, 0
    %v278 = vsel %vm171, %v271, 0
    %280 = vmatpush.msra.mxu0 0.0
    %281 = vmatpush.msra.mxu0 0.0
    %282 = vmatpush.msra.mxu0 0.0
    %283 = vmatpush.msra.mxu0 0.0
    %284 = vmatpush.msra.mxu0 0.0
    %285 = vmatpush.msra.mxu0 0.0
    %286 = vmatpush.msra.mxu0 0.0
    %287 = vmatpush.msra.mxu0 0.0
    %288 = vmatpush.msra.mxu0 0.0
    %289 = vmatpush.msra.mxu0 0.0
    %290 = vmatpush.msra.mxu0 0.0
    %291 = vmatpush.msra.mxu0 0.0
    %292 = vmatpush.msra.mxu0 %v93
    %293 = vmatpush.msra.mxu0 %v92
    %294 = vmatpush.msra.mxu0 %v91
    %295 = vmatpush.msra.mxu0 %v90
    %296 = vmatmul.f32.gmra.mxu0 %v275
    %v297 = vpop.f32.mrf.mxu0
    %v298 = vadd.f32 %v273, %v297
    %299 = vmatmul.f32.gmra.mxu0 %v278
    %v300 = vpop.f32.mrf.mxu0
    %v301 = vadd.f32 %v273, %v300
    %302 = vdwg.mxu0
    %vm305 = vcmask 1042432
    %v306 = vrot.slane %v298, 5
    %v307 = vrot.slane %v301, 5
    %v308 = vsel %vm305, %v306, %v307
    %v312 = vsel %vm305, 0.0, %v306
    %v313 = vperm.slane %v122, 3
    %v314 = vmul.f32 %v298, %v313
    %v315 = vmul.f32 %v301, %v313
    %316 = vset.pattern.permute.xlu0 33
    %317 = vperm.xlu0 %316, %v112
    %v318 = vpop.permute.xlu0 %317
    %319 = vset.pattern.permute.xlu0 33
    %320 = vperm.xlu0 %319, %v113
    %v321 = vpop.permute.xlu0 %320
    %vm322 = vcmask 1041408
    %v323 = vrot.slane %v318, 6
    %v324 = vrot.slane %v321, 6
    %v325 = vsel %vm322, %v323, %v324
    %v329 = vmul.f32 %v312, %v323
    %v330 = vmul.f32 %v308, %v325
    %v331 = vmul.f32 %v307, %v324
    %v332 = vperm.slane %v122, 2
    %v333 = vmul.f32 %v329, %v332
    %v334 = vmul.f32 %v330, %v332
    %v335 = vmul.f32 %v331, %v332
    %vm339 = vcmask 1045504
    %v340 = vrot.slane %v333, 2
    %v341 = vrot.slane %v334, 2
    %v342 = vsel %vm339, %v340, %v341
    %v343 = vrot.slane %v335, 2
    %v344 = vsel %vm339, %v341, %v343
    %v347 = vadd.f32 %v314, %v342
    %v348 = vadd.f32 %v315, %v344
    %349 = vset.pattern.permute.xlu0 34
    %350 = vperm.xlu0 %349, %v112
    %v351 = vpop.permute.xlu0 %350
    %352 = vset.pattern.permute.xlu0 34
    %353 = vperm.xlu0 %352, %v113
    %v354 = vpop.permute.xlu0 %353
    %vm355 = vcmask 1040384
    %v356 = vrot.slane %v351, 7
    %v357 = vrot.slane %v354, 7
    %v358 = vsel %vm355, %v356, %v357
    %v362 = vmul.f32 %v312, %v356
    %v363 = vmul.f32 %v308, %v358
    %v364 = vmul.f32 %v307, %v357
    %v365 = vperm.slane %v122, 1
    %v366 = vmul.f32 %v362, %v365
    %v367 = vmul.f32 %v363, %v365
    %v368 = vmul.f32 %v364, %v365
    %vm372 = vcmask 1046528
    %v373 = vrot.slane %v366, 1
    %v374 = vrot.slane %v367, 1
    %v375 = vsel %vm372, %v373, %v374
    %v376 = vrot.slane %v368, 1
    %v377 = vsel %vm372, %v374, %v376
    %v380 = vadd.f32 %v347, %v375
    %v381 = vadd.f32 %v348, %v377
    %382 = vset.pattern.permute.xlu0 35
    %383 = vperm.xlu0 %382, %v112
    %v384 = vpop.permute.xlu0 %383
    %386 = vset.pattern.permute.xlu0 35
    %387 = vperm.xlu0 %386, %v113
    %v388 = vpop.permute.xlu0 %387
    %v390 = vmul.f32 %v312, %v384
    %v391 = vmul.f32 %v308, %v388
    %v392 = vperm.slane %v122, 0
    %v393 = vmul.f32 %v390, %v392
    %v394 = vmul.f32 %v391, %v392
    %v395 = vadd.f32 %v380, %v393
    %v396 = vadd.f32 %v381, %v394
    %v397 = vperm.slane %v118, 0
    %v398 = vadd.f32 %v395, %v397
    %v399 = vadd.f32 %v396, %v397
    %v400 = vxor.u32 %v398, 2147483648
    %v401 = vxor.u32 %v399, 2147483648
    %v402 = vmul.f32 %v400, 1.442695
    %v403 = vpow.pop %v402
    %v404 = vmul.f32 %v401, 1.442695
    %v405 = vpow.pop %v404
    %v406 = vadd.f32 %v403, 1.0
    %v407 = vadd.f32 %v405, 1.0
    %v408 = vrcp.pop %v406
    %v409 = vmul.f32 %v406, %v408
    %v410 = vsub.f32 1.0, %v409
    %v411 = vmul.f32 %v408, %v410
    %v412 = vadd.f32 %v408, %v411
    %vm413 = vweird.f32 %v406
    %vm414 = vweird.f32 %v408
    %vm415 = vmor %vm413, %vm414
    %v416 = vsel %vm415, %v408, %v412
    %v417 = vand.u32 2147483647, %v406
    %vm418 = vcmp.eq.f32.partialorder %v417, 8.507059e+37
    %v419 = vand.u32 %v406, 2147483648
    %v420 = vor.u32 1.1754944e-38, %v419
    %v421 = vsel %vm418, %v420, %v416
    %v422 = vmul.f32 1.0, %v421
    %v423 = vrcp.pop %v407
    %v424 = vmul.f32 %v407, %v423
    %v425 = vsub.f32 1.0, %v424
    %v426 = vmul.f32 %v423, %v425
    %v427 = vadd.f32 %v423, %v426
    %vm428 = vweird.f32 %v407
    %vm429 = vweird.f32 %v423
    %vm430 = vmor %vm428, %vm429
    %v431 = vsel %vm430, %v423, %v427
    %v432 = vand.u32 2147483647, %v407
    %vm433 = vcmp.eq.f32.partialorder %v432, 8.507059e+37
    %v434 = vand.u32 %v407, 2147483648
    %v435 = vor.u32 1.1754944e-38, %v434
    %v436 = vsel %vm433, %v435, %v431
    %v437 = vmul.f32 1.0, %v436
    %v438 = vmul.f32 %v398, %v422
    %v439 = vmul.f32 %v399, %v437
    %v440 = vperm.slane %v119, 0
    %v442 = vsel %vm145, %v438, 0
    %v445 = vsel %vm145, %v439, 0
    %447 = vmatpush.msra.mxu0 0.0
    %448 = vmatpush.msra.mxu0 0.0
    %449 = vmatpush.msra.mxu0 0.0
    %450 = vmatpush.msra.mxu0 0.0
    %451 = vmatpush.msra.mxu0 0.0
    %452 = vmatpush.msra.mxu0 0.0
    %453 = vmatpush.msra.mxu0 0.0
    %454 = vmatpush.msra.mxu0 0.0
    %455 = vmatpush.msra.mxu0 %v101
    %456 = vmatpush.msra.mxu0 %v100
    %457 = vmatpush.msra.mxu0 %v99
    %458 = vmatpush.msra.mxu0 %v98
    %459 = vmatpush.msra.mxu0 %v97
    %460 = vmatpush.msra.mxu0 %v96
    %461 = vmatpush.msra.mxu0 %v95
    %462 = vmatpush.msra.mxu0 %v94
    %463 = vmatmul.f32.gmra.mxu0 %v442
    %v464 = vpop.f32.mrf.mxu0
    %v465 = vadd.f32 %v440, %v464
    %466 = vmatmul.f32.gmra.mxu0 %v445
    %v467 = vpop.f32.mrf.mxu0
    %v468 = vadd.f32 %v440, %v467
    %469 = vdwg.mxu0
    %v470 = vmax.f32 %v465, 0.0
    %v471 = vmax.f32 %v468, 0.0
    %v472 = vand.u32 2147483647, %v465
    %v473 = vand.u32 2147483647, %v468
    %v474 = vsub.f32 0.0, %v472
    %v475 = vsub.f32 0.0, %v473
    %v476 = vmul.f32 %v474, 1.442695
    %v477 = vpow.pop %v476
    %v478 = vmul.f32 %v475, 1.442695
    %v479 = vpow.pop %v478
    %v480 = vadd.f32 %v477, 1.0
    %v481 = vadd.f32 %v479, 1.0
    %v482 = vlog2.pop %v480
    %v483 = vmul.f32 %v482, 0.6931472
    %v484 = vlog2.pop %v481
    %v485 = vmul.f32 %v484, 0.6931472
    %v486 = vadd.f32 %v470, %v483
    %v487 = vadd.f32 %v471, %v485
    %v489 = vsel %vm145, %v110, 0
    %v492 = vsel %vm145, %v111, 0
    %494 = vmatpush.xpose.msra.mxu0 0.0
    %495 = vmatpush.xpose.msra.mxu0 0.0
    %496 = vmatpush.xpose.msra.mxu0 0.0
    %497 = vmatpush.xpose.msra.mxu0 0.0
    %498 = vmatpush.xpose.msra.mxu0 0.0
    %499 = vmatpush.xpose.msra.mxu0 0.0
    %500 = vmatpush.xpose.msra.mxu0 0.0
    %501 = vmatpush.xpose.msra.mxu0 0.0
    %502 = vmatpush.xpose.msra.mxu0 0.0
    %503 = vmatpush.xpose.msra.mxu0 0.0
    %504 = vmatpush.xpose.msra.mxu0 0.0
    %505 = vmatpush.xpose.msra.mxu0 0.0
    %506 = vmatpush.xpose.msra.mxu0 0.0
    %507 = vmatpush.xpose.msra.mxu0 0.0
    %508 = vmatpush.xpose.msra.mxu0 %v445
    %509 = vmatpush.xpose.msra.mxu0 %v442
    %510 = vmatmul.f32.gmra.mxu0 %v489
    %v511 = vpop.f32.mrf.mxu0
    %v512 = vadd.f32 0.0, %v511
    %513 = vmatmul.f32.gmra.mxu0 %v492
    %v514 = vpop.f32.mrf.mxu0
    %v515 = vadd.f32 0.0, %v514
    %516 = vdwg.mxu0
    %v517 = vmul.f32 %v486, %v438
    %v518 = vmul.f32 %v487, %v439
    %v519 = vperm.slane %v486, 0
    %v520 = vmul.f32 %v519, %v123
    %v521 = vmul.f32 %v520, 1.442695
    %v522 = vpow.pop %v521
    %524 = vset.pattern.permute.xlu0 0
    %525 = vperm.xlu0 %524, %v512
    %v526 = vpop.permute.xlu0 %525
    %v528 = vperm.slane %v517, 0
    %v529 = vmul.f32 %v526, %v528
    %v530 = vmul.f32 %v522, 0.0
    %v531 = vadd.f32 %v530, %v529
    %533 = vset.pattern.permute.xlu0 0
    %534 = vperm.xlu0 %533, %v515
    %v535 = vpop.permute.xlu0 %534
    %v537 = vmul.f32 %v531, %v535
    %v538 = vsel %vm145, %v537, 0.0
    %v539 = vrot.slane %v538, 4
    %v540 = vadd.f32 %v538, %v539
    %v541 = vrot.slane %v540, 2
    %v542 = vadd.f32 %v540, %v541
    %v543 = vrot.slane %v542, 1
    %v544 = vadd.f32 %v542, %v543
    %v545 = vperm.slane %v486, 1
    %v546 = vmul.f32 %v545, %v123
    %v547 = vmul.f32 %v546, 1.442695
    %v548 = vpow.pop %v547
    %549 = vset.pattern.permute.xlu0 1
    %550 = vperm.xlu0 %549, %v512
    %v551 = vpop.permute.xlu0 %550
    %v553 = vperm.slane %v517, 1
    %v554 = vmul.f32 %v551, %v553
    %v555 = vmul.f32 %v548, %v531
    %v556 = vadd.f32 %v555, %v554
    %557 = vset.pattern.permute.xlu0 1
    %558 = vperm.xlu0 %557, %v515
    %v559 = vpop.permute.xlu0 %558
    %v561 = vmul.f32 %v556, %v559
    %v562 = vsel %vm145, %v561, 0.0
    %v563 = vrot.slane %v562, 4
    %v564 = vadd.f32 %v562, %v563
    %v565 = vrot.slane %v564, 2
    %v566 = vadd.f32 %v564, %v565
    %v567 = vrot.slane %v566, 1
    %v568 = vadd.f32 %v566, %v567
    %v569 = vperm.slane %v486, 2
    %v570 = vmul.f32 %v569, %v123
    %v571 = vmul.f32 %v570, 1.442695
    %v572 = vpow.pop %v571
    %573 = vset.pattern.permute.xlu0 2
    %574 = vperm.xlu0 %573, %v512
    %v575 = vpop.permute.xlu0 %574
    %v577 = vperm.slane %v517, 2
    %v578 = vmul.f32 %v575, %v577
    %v579 = vmul.f32 %v572, %v556
    %v580 = vadd.f32 %v579, %v578
    %581 = vset.pattern.permute.xlu0 2
    %582 = vperm.xlu0 %581, %v515
    %v583 = vpop.permute.xlu0 %582
    %v585 = vmul.f32 %v580, %v583
    %v586 = vsel %vm145, %v585, 0.0
    %v587 = vrot.slane %v586, 4
    %v588 = vadd.f32 %v586, %v587
    %v589 = vrot.slane %v588, 2
    %v590 = vadd.f32 %v588, %v589
    %v591 = vrot.slane %v590, 1
    %v592 = vadd.f32 %v590, %v591
    %v593 = vperm.slane %v486, 3
    %v594 = vmul.f32 %v593, %v123
    %v595 = vmul.f32 %v594, 1.442695
    %v596 = vpow.pop %v595
    %597 = vset.pattern.permute.xlu0 3
    %598 = vperm.xlu0 %597, %v512
    %v599 = vpop.permute.xlu0 %598
    %v601 = vperm.slane %v517, 3
    %v602 = vmul.f32 %v599, %v601
    %v603 = vmul.f32 %v596, %v580
    %v604 = vadd.f32 %v603, %v602
    %605 = vset.pattern.permute.xlu0 3
    %606 = vperm.xlu0 %605, %v515
    %v607 = vpop.permute.xlu0 %606
    %v609 = vmul.f32 %v604, %v607
    %v610 = vsel %vm145, %v609, 0.0
    %v611 = vrot.slane %v610, 4
    %v612 = vadd.f32 %v610, %v611
    %v613 = vrot.slane %v612, 2
    %v614 = vadd.f32 %v612, %v613
    %v615 = vrot.slane %v614, 1
    %v616 = vadd.f32 %v614, %v615
    %v617 = vperm.slane %v486, 4
    %v618 = vmul.f32 %v617, %v123
    %v619 = vmul.f32 %v618, 1.442695
    %v620 = vpow.pop %v619
    %621 = vset.pattern.permute.xlu0 4
    %622 = vperm.xlu0 %621, %v512
    %v623 = vpop.permute.xlu0 %622
    %v625 = vperm.slane %v517, 4
    %v626 = vmul.f32 %v623, %v625
    %v627 = vmul.f32 %v620, %v604
    %v628 = vadd.f32 %v627, %v626
    %629 = vset.pattern.permute.xlu0 4
    %630 = vperm.xlu0 %629, %v515
    %v631 = vpop.permute.xlu0 %630
    %v633 = vmul.f32 %v628, %v631
    %v634 = vsel %vm145, %v633, 0.0
    %v635 = vrot.slane %v634, 4
    %v636 = vadd.f32 %v634, %v635
    %v637 = vrot.slane %v636, 2
    %v638 = vadd.f32 %v636, %v637
    %v639 = vrot.slane %v638, 1
    %v640 = vadd.f32 %v638, %v639
    %v641 = vperm.slane %v486, 5
    %v642 = vmul.f32 %v641, %v123
    %v643 = vmul.f32 %v642, 1.442695
    %v644 = vpow.pop %v643
    %645 = vset.pattern.permute.xlu0 5
    %646 = vperm.xlu0 %645, %v512
    %v647 = vpop.permute.xlu0 %646
    %v649 = vperm.slane %v517, 5
    %v650 = vmul.f32 %v647, %v649
    %v651 = vmul.f32 %v644, %v628
    %v652 = vadd.f32 %v651, %v650
    %653 = vset.pattern.permute.xlu0 5
    %654 = vperm.xlu0 %653, %v515
    %v655 = vpop.permute.xlu0 %654
    %v657 = vmul.f32 %v652, %v655
    %v658 = vsel %vm145, %v657, 0.0
    %v659 = vrot.slane %v658, 4
    %v660 = vadd.f32 %v658, %v659
    %v661 = vrot.slane %v660, 2
    %v662 = vadd.f32 %v660, %v661
    %v663 = vrot.slane %v662, 1
    %v664 = vadd.f32 %v662, %v663
    %v665 = vperm.slane %v486, 6
    %v666 = vmul.f32 %v665, %v123
    %v667 = vmul.f32 %v666, 1.442695
    %v668 = vpow.pop %v667
    %669 = vset.pattern.permute.xlu0 6
    %670 = vperm.xlu0 %669, %v512
    %v671 = vpop.permute.xlu0 %670
    %v673 = vperm.slane %v517, 6
    %v674 = vmul.f32 %v671, %v673
    %v675 = vmul.f32 %v668, %v652
    %v676 = vadd.f32 %v675, %v674
    %677 = vset.pattern.permute.xlu0 6
    %678 = vperm.xlu0 %677, %v515
    %v679 = vpop.permute.xlu0 %678
    %v681 = vmul.f32 %v676, %v679
    %v682 = vsel %vm145, %v681, 0.0
    %v683 = vrot.slane %v682, 4
    %v684 = vadd.f32 %v682, %v683
    %v685 = vrot.slane %v684, 2
    %v686 = vadd.f32 %v684, %v685
    %v687 = vrot.slane %v686, 1
    %v688 = vadd.f32 %v686, %v687
    %v689 = vperm.slane %v486, 7
    %v690 = vmul.f32 %v689, %v123
    %v691 = vmul.f32 %v690, 1.442695
    %v692 = vpow.pop %v691
    %693 = vset.pattern.permute.xlu0 7
    %694 = vperm.xlu0 %693, %v512
    %v695 = vpop.permute.xlu0 %694
    %v697 = vperm.slane %v517, 7
    %v698 = vmul.f32 %v695, %v697
    %v699 = vmul.f32 %v692, %v676
    %v700 = vadd.f32 %v699, %v698
    %701 = vset.pattern.permute.xlu0 7
    %702 = vperm.xlu0 %701, %v515
    %v703 = vpop.permute.xlu0 %702
    %v705 = vmul.f32 %v700, %v703
    %v706 = vsel %vm145, %v705, 0.0
    %v707 = vrot.slane %v706, 4
    %v708 = vadd.f32 %v706, %v707
    %v709 = vrot.slane %v708, 2
    %v710 = vadd.f32 %v708, %v709
    %v711 = vrot.slane %v710, 1
    %v712 = vadd.f32 %v710, %v711
    %v713 = vperm.slane %v487, 0
    %v714 = vmul.f32 %v713, %v123
    %v715 = vmul.f32 %v714, 1.442695
    %v716 = vpow.pop %v715
    %717 = vset.pattern.permute.xlu0 8
    %718 = vperm.xlu0 %717, %v512
    %v719 = vpop.permute.xlu0 %718
    %v721 = vperm.slane %v518, 0
    %v722 = vmul.f32 %v719, %v721
    %v723 = vmul.f32 %v716, 0.0
    %v724 = vadd.f32 %v723, %v722
    %725 = vset.pattern.permute.xlu0 8
    %726 = vperm.xlu0 %725, %v515
    %v727 = vpop.permute.xlu0 %726
    %v729 = vmul.f32 %v724, %v727
    %v730 = vsel %vm145, %v729, 0.0
    %v731 = vrot.slane %v730, 4
    %v732 = vadd.f32 %v730, %v731
    %v733 = vrot.slane %v732, 2
    %v734 = vadd.f32 %v732, %v733
    %v735 = vrot.slane %v734, 1
    %v736 = vadd.f32 %v734, %v735
    %v737 = vperm.slane %v487, 1
    %v738 = vmul.f32 %v737, %v123
    %v739 = vmul.f32 %v738, 1.442695
    %v740 = vpow.pop %v739
    %741 = vset.pattern.permute.xlu0 9
    %742 = vperm.xlu0 %741, %v512
    %v743 = vpop.permute.xlu0 %742
    %v745 = vperm.slane %v518, 1
    %v746 = vmul.f32 %v743, %v745
    %v747 = vmul.f32 %v740, %v724
    %v748 = vadd.f32 %v747, %v746
    %749 = vset.pattern.permute.xlu0 9
    %750 = vperm.xlu0 %749, %v515
    %v751 = vpop.permute.xlu0 %750
    %v753 = vmul.f32 %v748, %v751
    %v754 = vsel %vm145, %v753, 0.0
    %v755 = vrot.slane %v754, 4
    %v756 = vadd.f32 %v754, %v755
    %v757 = vrot.slane %v756, 2
    %v758 = vadd.f32 %v756, %v757
    %v759 = vrot.slane %v758, 1
    %v760 = vadd.f32 %v758, %v759
    %v761 = vperm.slane %v487, 2
    %v762 = vmul.f32 %v761, %v123
    %v763 = vmul.f32 %v762, 1.442695
    %v764 = vpow.pop %v763
    %765 = vset.pattern.permute.xlu0 10
    %766 = vperm.xlu0 %765, %v512
    %v767 = vpop.permute.xlu0 %766
    %v769 = vperm.slane %v518, 2
    %v770 = vmul.f32 %v767, %v769
    %v771 = vmul.f32 %v764, %v748
    %v772 = vadd.f32 %v771, %v770
    %773 = vset.pattern.permute.xlu0 10
    %774 = vperm.xlu0 %773, %v515
    %v775 = vpop.permute.xlu0 %774
    %v777 = vmul.f32 %v772, %v775
    %v778 = vsel %vm145, %v777, 0.0
    %v779 = vrot.slane %v778, 4
    %v780 = vadd.f32 %v778, %v779
    %v781 = vrot.slane %v780, 2
    %v782 = vadd.f32 %v780, %v781
    %v783 = vrot.slane %v782, 1
    %v784 = vadd.f32 %v782, %v783
    %v785 = vperm.slane %v487, 3
    %v786 = vmul.f32 %v785, %v123
    %v787 = vmul.f32 %v786, 1.442695
    %v788 = vpow.pop %v787
    %789 = vset.pattern.permute.xlu0 11
    %790 = vperm.xlu0 %789, %v512
    %v791 = vpop.permute.xlu0 %790
    %v793 = vperm.slane %v518, 3
    %v794 = vmul.f32 %v791, %v793
    %v795 = vmul.f32 %v788, %v772
    %v796 = vadd.f32 %v795, %v794
    %797 = vset.pattern.permute.xlu0 11
    %798 = vperm.xlu0 %797, %v515
    %v799 = vpop.permute.xlu0 %798
    %v801 = vmul.f32 %v796, %v799
    %v802 = vsel %vm145, %v801, 0.0
    %v803 = vrot.slane %v802, 4
    %v804 = vadd.f32 %v802, %v803
    %v805 = vrot.slane %v804, 2
    %v806 = vadd.f32 %v804, %v805
    %v807 = vrot.slane %v806, 1
    %v808 = vadd.f32 %v806, %v807
    %v809 = vperm.slane %v487, 4
    %v810 = vmul.f32 %v809, %v123
    %v811 = vmul.f32 %v810, 1.442695
    %v812 = vpow.pop %v811
    %813 = vset.pattern.permute.xlu0 12
    %814 = vperm.xlu0 %813, %v512
    %v815 = vpop.permute.xlu0 %814
    %v817 = vperm.slane %v518, 4
    %v818 = vmul.f32 %v815, %v817
    %v819 = vmul.f32 %v812, %v796
    %v820 = vadd.f32 %v819, %v818
    %821 = vset.pattern.permute.xlu0 12
    %822 = vperm.xlu0 %821, %v515
    %v823 = vpop.permute.xlu0 %822
    %v825 = vmul.f32 %v820, %v823
    %v826 = vsel %vm145, %v825, 0.0
    %v827 = vrot.slane %v826, 4
    %v828 = vadd.f32 %v826, %v827
    %v829 = vrot.slane %v828, 2
    %v830 = vadd.f32 %v828, %v829
    %v831 = vrot.slane %v830, 1
    %v832 = vadd.f32 %v830, %v831
    %v833 = vperm.slane %v487, 5
    %v834 = vmul.f32 %v833, %v123
    %v835 = vmul.f32 %v834, 1.442695
    %v836 = vpow.pop %v835
    %837 = vset.pattern.permute.xlu0 13
    %838 = vperm.xlu0 %837, %v512
    %v839 = vpop.permute.xlu0 %838
    %v841 = vperm.slane %v518, 5
    %v842 = vmul.f32 %v839, %v841
    %v843 = vmul.f32 %v836, %v820
    %v844 = vadd.f32 %v843, %v842
    %845 = vset.pattern.permute.xlu0 13
    %846 = vperm.xlu0 %845, %v515
    %v847 = vpop.permute.xlu0 %846
    %v849 = vmul.f32 %v844, %v847
    %v850 = vsel %vm145, %v849, 0.0
    %v851 = vrot.slane %v850, 4
    %v852 = vadd.f32 %v850, %v851
    %v853 = vrot.slane %v852, 2
    %v854 = vadd.f32 %v852, %v853
    %v855 = vrot.slane %v854, 1
    %v856 = vadd.f32 %v854, %v855
    %v857 = vperm.slane %v487, 6
    %v858 = vmul.f32 %v857, %v123
    %v859 = vmul.f32 %v858, 1.442695
    %v860 = vpow.pop %v859
    %861 = vset.pattern.permute.xlu0 14
    %862 = vperm.xlu0 %861, %v512
    %v863 = vpop.permute.xlu0 %862
    %v865 = vperm.slane %v518, 6
    %v866 = vmul.f32 %v863, %v865
    %v867 = vmul.f32 %v860, %v844
    %v868 = vadd.f32 %v867, %v866
    %869 = vset.pattern.permute.xlu0 14
    %870 = vperm.xlu0 %869, %v515
    %v871 = vpop.permute.xlu0 %870
    %v873 = vmul.f32 %v868, %v871
    %v874 = vsel %vm145, %v873, 0.0
    %v875 = vrot.slane %v874, 4
    %v876 = vadd.f32 %v874, %v875
    %v877 = vrot.slane %v876, 2
    %v878 = vadd.f32 %v876, %v877
    %v879 = vrot.slane %v878, 1
    %v880 = vadd.f32 %v878, %v879
    %v881 = vperm.slane %v487, 7
    %v882 = vmul.f32 %v881, %v123
    %v883 = vmul.f32 %v882, 1.442695
    %v884 = vpow.pop %v883
    %885 = vset.pattern.permute.xlu0 15
    %886 = vperm.xlu0 %885, %v512
    %v887 = vpop.permute.xlu0 %886
    %v889 = vperm.slane %v518, 7
    %v890 = vmul.f32 %v887, %v889
    %v891 = vmul.f32 %v884, %v868
    %v892 = vadd.f32 %v891, %v890
    %893 = vset.pattern.permute.xlu0 15
    %894 = vperm.xlu0 %893, %v515
    %v895 = vpop.permute.xlu0 %894
    %v897 = vmul.f32 %v892, %v895
    %v898 = vsel %vm145, %v897, 0.0
    %v899 = vrot.slane %v898, 4
    %v900 = vadd.f32 %v898, %v899
    %v901 = vrot.slane %v900, 2
    %v902 = vadd.f32 %v900, %v901
    %v903 = vrot.slane %v902, 1
    %v904 = vadd.f32 %v902, %v903
    %v905 = vsel %vm355, %v544, %v568
    %v906 = vsel %vm322, %v905, %v592
    %v907 = vsel %vm305, %v906, %v616
    %vm908 = vcmask 1043456
    %v909 = vsel %vm908, %v907, %v640
    %vm910 = vcmask 1044480
    %v911 = vsel %vm910, %v909, %v664
    %v912 = vsel %vm339, %v911, %v688
    %v913 = vsel %vm372, %v912, %v712
    %v914 = vsel %vm355, %v736, %v760
    %v915 = vsel %vm322, %v914, %v784
    %v916 = vsel %vm305, %v915, %v808
    %v917 = vsel %vm908, %v916, %v832
    %v918 = vsel %vm910, %v917, %v856
    %v919 = vsel %vm339, %v918, %v880
    %v920 = vsel %vm372, %v919, %v904
    %v921 = vperm.slane %v120, 0
    %v922 = vmul.f32 %v921, %v438
    %v923 = vmul.f32 %v921, %v439
    %v924 = vadd.f32 %v913, %v922
    %v925 = vadd.f32 %v920, %v923
    %v926 = vxor.u32 %v298, 2147483648
    %v927 = vxor.u32 %v301, 2147483648
    %v928 = vmul.f32 %v926, 1.442695
    %v929 = vpow.pop %v928
    %v930 = vmul.f32 %v927, 1.442695
    %v931 = vpow.pop %v930
    %v932 = vadd.f32 %v929, 1.0
    %v933 = vadd.f32 %v931, 1.0
    %v934 = vrcp.pop %v932
    %v935 = vmul.f32 %v932, %v934
    %v936 = vsub.f32 1.0, %v935
    %v937 = vmul.f32 %v934, %v936
    %v938 = vadd.f32 %v934, %v937
    %vm939 = vweird.f32 %v932
    %vm940 = vweird.f32 %v934
    %vm941 = vmor %vm939, %vm940
    %v942 = vsel %vm941, %v934, %v938
    %v943 = vand.u32 2147483647, %v932
    %vm944 = vcmp.eq.f32.partialorder %v943, 8.507059e+37
    %v945 = vand.u32 %v932, 2147483648
    %v946 = vor.u32 1.1754944e-38, %v945
    %v947 = vsel %vm944, %v946, %v942
    %v948 = vmul.f32 1.0, %v947
    %v949 = vrcp.pop %v933
    %v950 = vmul.f32 %v933, %v949
    %v951 = vsub.f32 1.0, %v950
    %v952 = vmul.f32 %v949, %v951
    %v953 = vadd.f32 %v949, %v952
    %vm954 = vweird.f32 %v933
    %vm955 = vweird.f32 %v949
    %vm956 = vmor %vm954, %vm955
    %v957 = vsel %vm956, %v949, %v953
    %v958 = vand.u32 2147483647, %v933
    %vm959 = vcmp.eq.f32.partialorder %v958, 8.507059e+37
    %v960 = vand.u32 %v933, 2147483648
    %v961 = vor.u32 1.1754944e-38, %v960
    %v962 = vsel %vm959, %v961, %v957
    %v963 = vmul.f32 1.0, %v962
    %v964 = vmul.f32 %v298, %v948
    %v965 = vmul.f32 %v301, %v963
    %968 = vrot.lane.b32.xlu0 %v964, 64
    %v969 = vpop.permute.xlu0 %968
    %970 = vrot.lane.b32.xlu0 %v965, 64
    %v971 = vpop.permute.xlu0 %970
    %v974 = vmul.f32 %v924, %v969
    %v975 = vmul.f32 %v925, %v971
    %v976 = vperm.slane %v121, 0
    %v978 = vsel %vm145, %v974, 0
    %v981 = vsel %vm145, %v975, 0
    %983 = vmatpush.msra.mxu0 0.0
    %984 = vmatpush.msra.mxu0 0.0
    %985 = vmatpush.msra.mxu0 0.0
    %986 = vmatpush.msra.mxu0 0.0
    %987 = vmatpush.msra.mxu0 0.0
    %988 = vmatpush.msra.mxu0 0.0
    %989 = vmatpush.msra.mxu0 0.0
    %990 = vmatpush.msra.mxu0 0.0
    %991 = vmatpush.msra.mxu0 %v109
    %992 = vmatpush.msra.mxu0 %v108
    %993 = vmatpush.msra.mxu0 %v107
    %994 = vmatpush.msra.mxu0 %v106
    %995 = vmatpush.msra.mxu0 %v105
    %996 = vmatpush.msra.mxu0 %v104
    %997 = vmatpush.msra.mxu0 %v103
    %998 = vmatpush.msra.mxu0 %v102
    %999 = vmatmul.f32.gmra.mxu0 %v978
    %v1000 = vpop.f32.mrf.mxu0
    %v1001 = vadd.f32 %v976, %v1000
    %1002 = vmatmul.f32.gmra.mxu0 %v981
    %v1003 = vpop.f32.mrf.mxu0
    %v1004 = vadd.f32 %v976, %v1003
    %1005 = vdwg.mxu0
    %1006 = vrot.lane.b32.xlu0 %v112, 112
    %v1007 = vpop.permute.xlu0 %1006
    %1008 = vrot.lane.b32.xlu0 %v113, 112
    %v1009 = vpop.permute.xlu0 %1008
    %v1010 = vsel %vm243, %v1007, 0
    %v1012 = vsel %vm243, %v1009, 0
    %1014 = vmatpush.msra.mxu0 0.0
    %1015 = vmatpush.msra.mxu0 0.0
    %1016 = vmatpush.msra.mxu0 0.0
    %1017 = vmatpush.msra.mxu0 0.0
    %1018 = vmatpush.msra.mxu0 0.0
    %1019 = vmatpush.msra.mxu0 0.0
    %1020 = vmatpush.msra.mxu0 0.0
    %1021 = vmatpush.msra.mxu0 0.0
    %1022 = vmatpush.msra.mxu0 0.0
    %1023 = vmatpush.msra.mxu0 0.0
    %1024 = vmatpush.msra.mxu0 0.0
    %1025 = vmatpush.msra.mxu0 0.0
    %1026 = vmatpush.msra.mxu0 0.0
    %1027 = vmatpush.msra.mxu0 0.0
    %1028 = vmatpush.msra.mxu0 %v1004
    %1029 = vmatpush.msra.mxu0 %v1001
    %1030 = vmatmul.f32.gmra.mxu0 %v1010
    %v1031 = vpop.f32.mrf.mxu0
    %v1032 = vadd.f32 0.0, %v1031
    %1033 = vmatmul.f32.gmra.mxu0 %v1012
    %v1034 = vpop.f32.mrf.mxu0
    %v1035 = vadd.f32 0.0, %v1034
    %1036 = vdwg.mxu0
    %1039 = vrot.lane.b32.xlu0 %v1032, 64
    %v1040 = vpop.permute.xlu0 %1039
    %1041 = vrot.lane.b32.xlu0 %v1035, 64
    %v1042 = vpop.permute.xlu0 %1041
    %v1045 = vmul.f32 %v169, %v1040
    %v1046 = vmul.f32 %v170, %v1042
    %1049 = vrot.lane.b32.xlu0 %v1045, 64
    %v1050 = vpop.permute.xlu0 %1049
    %1051 = vrot.lane.b32.xlu0 %v1046, 64
    %v1052 = vpop.permute.xlu0 %1051
    %v1055 = vadd.f32 %v79, %v1050
    %v1056 = vadd.f32 %v80, %v1052
    %1057 = vst.msk [vmem:[#allocation10] sm:$0xff] %vm171, %v1055
    %1058 = vst.msk [vmem:[#allocation10 + $0x8] sm:$0xff] %vm171, %v1056
    // Predicated region
    $region34: #{tpu_custom_call.1} parent=1 // pred_check
      _
    $region35: #{tpu_custom_call.1} parent=1 // pred_check_branch
      %1060 = sbr.rel (0) target = $region37
    $region36: #{tpu_custom_call.1} parent=1 // pred_region
      %1062 = vsyncadd [#allocation4], 0
      %s1063 = sshll.u32 [#allocation10], 4
      %s1064 = int_to_ptr.vmem [resolvable:$true] %s1063
      %s1065 = sshll.u32 %s4, 4
      %s1066 = int_to_ptr.hbm [resolvable:$true] %s1065
      %1071 = dma.vmem_to_hbm [thread:$0]  %s1064, 256, %s1066, [#allocation4], 128, 128, 8
    $region37: #{tpu_custom_call.1} parent=1 // pred_fallthru
      _
    // Predicated region
    $region38: #{tpu_custom_call.1} parent=1 // pred_check
      _
    $region39: #{tpu_custom_call.1} parent=1 // pred_check_branch
      %1073 = sbr.rel (0) target = $region41
    $region40: #{tpu_custom_call.1} parent=1 // pred_region
      %1075 = dma.done [#allocation4], 256
    $region41: #{tpu_custom_call.1} parent=1 // pred_fallthru
      _
    %1076 = vsyncpa [#allocation3], 1
    %1077 = vsyncpa [#allocation6], 1
    %1078 = vsyncpa [#allocation9], 1
    %1079 = vsyncpa [#allocation4], 1

</llo_original>
